<compile_context>
chip_gen: v7x
topology: tpu7x:2x2x1
jax: 0.10.0
libtpu: 0.0.40
codegen_flags: <defaults>
</compile_context>

<pallas_src>
import jax
import jax.numpy as jnp
from jax.experimental import pallas as pl
from jax.experimental.pallas import tpu as pltpu

BN_EPS = 1e-5


def gin_kernel(a_ref, h_ref, w1_0_ref, w2_0_ref, w1_1_ref, w2_1_ref, sp_ref, out_ref):
    # a_ref:  (G*N, G*N) bf16 block-diagonal (A + I) for the G graphs of this step
    # h_ref:  (G*N, fin)  bf16 stacked node features
    # w*_ref: bf16 weights;  sp_ref: (6, hid) f32 = [g0, be0, b2_0, g1, be1, b2_1]
    # out_ref: (G, hid) f32 per-graph mean readout
    G, hid = out_ref.shape
    GN = h_ref.shape[0]
    N = GN // G

    A = a_ref[...]
    sp = sp_ref[...]

    def conv_front(h_bf16, w1_ref, g, be):
        # GINConv sum aggregation, eps = 0, self term folded into A: (A + I) @ h.
        agg = jnp.dot(A, h_bf16, preferred_element_type=jnp.float32)        # (GN, F) f32
        # MLP Linear1 -- bias dropped: exactly cancelled by BN mean subtraction.
        z = jnp.dot(agg.astype(jnp.bfloat16), w1_ref[...],
                    preferred_element_type=jnp.float32)                     # (GN, hid) f32
        # BatchNorm1d, training-mode biased batch stats, per graph, all f32.
        z3 = z.reshape(G, N, hid)
        mu = jnp.mean(z3, axis=1, keepdims=True)
        var = jnp.mean(jnp.square(z3 - mu), axis=1, keepdims=True)
        zn = (z3 - mu) * jax.lax.rsqrt(var + BN_EPS) * g + be
        return jnp.maximum(zn, 0.0)                                          # (G, N, hid)

    # Layer 0: MLP Linear2 + post-layer ReLU (non-last layer).
    zr0 = conv_front(h_ref[...], w1_0_ref, sp[0:1], sp[1:2]).reshape(GN, hid)
    h1 = jnp.dot(zr0.astype(jnp.bfloat16), w2_0_ref[...],
                 preferred_element_type=jnp.float32) + sp[2:3]
    h1 = jnp.maximum(h1, 0.0)

    # Layer 1: commute the mean readout past the final Linear (exact -- nothing
    # nonlinear follows it) -> (G, hid) @ (hid, hid) instead of (G*N, hid) @ (hid, hid).
    zr1 = conv_front(h1.astype(jnp.bfloat16), w1_1_ref, sp[3:4], sp[4:5])
    pooled = jnp.mean(zr1, axis=1)                                           # (G, hid)
    out_ref[...] = jnp.dot(pooled.astype(jnp.bfloat16), w2_1_ref[...],
                           preferred_element_type=jnp.float32) + sp[5:6]


def _pick_group(batch, n_nodes, target_rows=256, min_steps=2):
    """Largest divisor of `batch` with group*N <= ~target_rows, keeping >= min_steps
    grid steps when possible (so both v7x TensorCores get work)."""
    g = max(1, min(batch, max(1, target_rows // max(n_nodes, 1))))
    while batch % g:
        g -= 1
    while g > 1 and batch // g < min_steps:
        g -= 1
        while g > 1 and batch % g:
            g -= 1
    return g


def gin_forward(adj, feats, params, group_size=None):
    """adj: (B, N, N) f32 with adj[v, u] = 1 iff edge u->v; feats: (B, N, Fin) f32.
    params: [w1, b1, gamma, beta, w2, b2] x 2 layers (b1 unused: cancelled by BN).
    Returns (B, 1, hid) mean-readout per graph."""
    B, N, _ = adj.shape
    fin = feats.shape[-1]
    w1_0, _b1_0, g0, be0, w2_0, b2_0 = params[0:6]
    w1_1, _b1_1, g1, be1, w2_1, b2_1 = params[6:12]
    hid = w2_1.shape[1]

    G = group_size if group_size is not None else _pick_group(B, N)
    assert B % G == 0, (B, G)
    S = B // G
    GN = G * N

    # Fold the GIN self-term into A once and pack G graphs into a block-diagonal
    # (G*N, G*N) matrix per grid step (bf16: 0/1/2 entries exact).
    # TODO(synk): at large N switch to per-graph / row-blocked A with streaming BN
    # accumulators (block-diag costs G x the HBM bytes; v7x has only 64 MiB VMEM).
    adj_i = adj + jnp.eye(N, dtype=adj.dtype)[None]
    a_bd = jnp.einsum('sgmn,gh->sgmhn', adj_i.reshape(S, G, N, N),
                      jnp.eye(G, dtype=adj.dtype)).reshape(S, GN, GN)
    a_bd = a_bd.astype(jnp.bfloat16)

    # Pre-cast matmul operands to bf16 in the wrapper (half DMA bytes, no in-kernel
    # casts); accumulation stays f32 inside the kernel.
    feats_r = feats.reshape(S, GN, fin).astype(jnp.bfloat16)
    w1_0b, w2_0b = w1_0.astype(jnp.bfloat16), w2_0.astype(jnp.bfloat16)
    w1_1b, w2_1b = w1_1.astype(jnp.bfloat16), w2_1.astype(jnp.bfloat16)

    # Pack the small per-layer vectors into a single (6, hid) f32 input.
    small = jnp.concatenate([g0, be0, b2_0, g1, be1, b2_1], axis=0)

    flops = S * (2 * GN * GN * fin + 2 * GN * fin * hid + 2 * GN * hid * hid
                 + 2 * GN * GN * hid + 2 * GN * hid * hid + 2 * G * hid * hid
                 + 16 * GN * hid)
    bytes_accessed = (a_bd.size * 2 + feats_r.size * 2
                      + 2 * (w1_0b.size + w2_0b.size + w1_1b.size + w2_1b.size)
                      + small.size * 4 + B * hid * 4)

    grid_spec = pltpu.PrefetchScalarGridSpec(
        num_scalar_prefetch=0,
        grid=(S,),                                               # G graphs per grid step
        in_specs=[
            pl.BlockSpec((None, GN, GN), lambda s: (s, 0, 0)),   # block-diag (A + I), bf16
            pl.BlockSpec((None, GN, fin), lambda s: (s, 0, 0)),  # stacked feats, bf16
            pl.BlockSpec((fin, hid), lambda s: (0, 0)),          # W1 layer 0
            pl.BlockSpec((hid, hid), lambda s: (0, 0)),          # W2 layer 0
            pl.BlockSpec((hid, hid), lambda s: (0, 0)),          # W1 layer 1
            pl.BlockSpec((hid, hid), lambda s: (0, 0)),          # W2 layer 1
            pl.BlockSpec((6, hid), lambda s: (0, 0)),            # packed gamma/beta/b2
        ],
        out_specs=pl.BlockSpec((None, G, hid), lambda s: (s, 0, 0)),
    )
    out = pl.pallas_call(
        gin_kernel,
        out_shape=jax.ShapeDtypeStruct((S, G, hid), jnp.float32),
        grid_spec=grid_spec,
        compiler_params=pltpu.CompilerParams(
            dimension_semantics=("parallel",),   # independent graph groups
            vmem_limit_bytes=32 * 1024 * 1024,   # < v7x physical 64 MiB; fine on v5e/v6e
        ),
        cost_estimate=pl.CostEstimate(
            flops=flops,
            transcendentals=B * 2 * hid,
            bytes_accessed=bytes_accessed,
        ),
    )(a_bd, feats_r, w1_0b, w2_0b, w1_1b, w2_1b, small)
    return out.reshape(B, 1, hid)


def make_params(key, in_size, hid_size):
    """Deterministic synthetic params for 2 GINConv layers (each wraps an MLP).
    b1 is generated (the PyTorch Linear has a bias) but is a mathematical no-op."""
    params = []
    dims = [(in_size, hid_size), (hid_size, hid_size)]
    for li, (din, dh) in enumerate(dims):
        keys = jax.random.split(jax.random.fold_in(key, li), 6)
        w1 = jax.random.normal(keys[0], (din, dh), jnp.float32) * 0.2   # stored (in, out)
        b1 = jax.random.normal(keys[1], (1, dh), jnp.float32) * 0.1
        g = 1.0 + 0.1 * jax.random.normal(keys[2], (1, dh), jnp.float32)
        be = 0.1 * jax.random.normal(keys[3], (1, dh), jnp.float32)
        w2 = jax.random.normal(keys[4], (dh, dh), jnp.float32) * 0.2
        b2 = jax.random.normal(keys[5], (1, dh), jnp.float32) * 0.1
        params += [w1, b1, g, be, w2, b2]
    return params


def reference_single(adj, feats, params):
    """Pure-JAX f32 reference matching the PyTorch GIN forward (defaults), one graph."""
    h = feats
    for li in range(2):
        w1, b1, g, be, w2, b2 = params[6 * li:6 * li + 6]
        agg = h + adj @ h
        z = agg @ w1 + b1
        mu = jnp.mean(z, axis=0, keepdims=True)
        var = jnp.var(z, axis=0, keepdims=True)            # biased, training-mode BN
        zn = (z - mu) / jnp.sqrt(var + BN_EPS) * g + be
        h = jnp.maximum(zn, 0.0) @ w2 + b2
        if li != 1:
            h = jnp.maximum(h, 0.0)
    return jnp.mean(h, axis=0, keepdims=True)              # (1, hid) mean readout


if __name__ == "__main__":
    B, N, IN, HID = 16, 32, 16, 16     # -> G = 8 graphs/step (G*N = 256), 2 grid steps
    key = jax.random.PRNGKey(0)
    k_adj, k_feat, k_par = jax.random.split(key, 3)

    # Batch of random directed graphs (no self-loops), dense A[v, u] = 1 iff edge u->v.
    adj = (jax.random.uniform(k_adj, (B, N, N)) < 0.15).astype(jnp.float32)
    adj = adj * (1.0 - jnp.eye(N, dtype=jnp.float32))
    feats = jax.random.normal(k_feat, (B, N, IN), jnp.float32)
    params = make_params(k_par, IN, HID)

    out = gin_forward(adj, feats, params)
    jax.block_until_ready(out)

    ref = jnp.stack([reference_single(adj[b], feats[b], params) for b in range(B)])
    assert out.shape == (B, 1, HID)
    # bf16 matmul inputs (f32 accumulation) vs. pure-f32 reference -> relaxed tolerance.
    assert jnp.allclose(out, ref, atol=2e-2, rtol=2e-2), float(jnp.max(jnp.abs(out - ref)))
    print("KERNEL_OK")
</pallas_src>

<mosaic_0001>
module attributes {stable_mosaic.version = 11 : i64} {
  func.func @gin_kernel(%arg0: i32, %arg1: memref<1x256x256xbf16, #tpu.memory_space<vmem>>, %arg2: memref<1x256x16xbf16, #tpu.memory_space<vmem>>, %arg3: memref<16x16xbf16, #tpu.memory_space<vmem>>, %arg4: memref<16x16xbf16, #tpu.memory_space<vmem>>, %arg5: memref<16x16xbf16, #tpu.memory_space<vmem>>, %arg6: memref<16x16xbf16, #tpu.memory_space<vmem>>, %arg7: memref<6x16xf32, #tpu.memory_space<vmem>>, %arg8: memref<1x8x16xf32, #tpu.memory_space<vmem>>) attributes {dimension_semantics = [#tpu.dimension_semantics<parallel>], iteration_bounds = array<i64: 2>, scalar_prefetch = 0 : i64, scratch_operands = 0 : i64, tpu.core_type = #tpu.core_type<tc>, window_params = [{transform_indices = @transform_0, window_bounds = array<i64: 1, 256, 256>}, {transform_indices = @transform_1, window_bounds = array<i64: 1, 256, 16>}, {pipeline_mode = #tpu.pipeline_mode<synchronous>, transform_indices = @transform_2, window_bounds = array<i64: 16, 16>}, {pipeline_mode = #tpu.pipeline_mode<synchronous>, transform_indices = @transform_3, window_bounds = array<i64: 16, 16>}, {pipeline_mode = #tpu.pipeline_mode<synchronous>, transform_indices = @transform_4, window_bounds = array<i64: 16, 16>}, {pipeline_mode = #tpu.pipeline_mode<synchronous>, transform_indices = @transform_5, window_bounds = array<i64: 16, 16>}, {pipeline_mode = #tpu.pipeline_mode<synchronous>, transform_indices = @transform_6, window_bounds = array<i64: 6, 16>}, {transform_indices = @transform_7, window_bounds = array<i64: 1, 8, 16>}]} {
    %c0 = arith.constant 0 : index
    %c0_0 = arith.constant 0 : index
    %c0_1 = arith.constant 0 : index
    %0 = vector.load %arg1[%c0, %c0_0, %c0_1] : memref<1x256x256xbf16, #tpu.memory_space<vmem>>, vector<1x256x256xbf16>
    %1 = vector.shape_cast %0 : vector<1x256x256xbf16> to vector<256x256xbf16>
    %c0_2 = arith.constant 0 : index
    %c0_3 = arith.constant 0 : index
    %2 = vector.load %arg7[%c0_2, %c0_3] : memref<6x16xf32, #tpu.memory_space<vmem>>, vector<6x16xf32>
    %c0_4 = arith.constant 0 : index
    %c0_5 = arith.constant 0 : index
    %c0_6 = arith.constant 0 : index
    %3 = vector.load %arg2[%c0_4, %c0_5, %c0_6] : memref<1x256x16xbf16, #tpu.memory_space<vmem>>, vector<1x256x16xbf16>
    %4 = vector.shape_cast %3 : vector<1x256x16xbf16> to vector<256x16xbf16>
    %5 = vector.extract_strided_slice %2 {offsets = [0, 0], sizes = [1, 16], strides = [1, 1]} : vector<6x16xf32> to vector<1x16xf32>
    %6 = vector.extract_strided_slice %2 {offsets = [1, 0], sizes = [1, 16], strides = [1, 1]} : vector<6x16xf32> to vector<1x16xf32>
    %cst = arith.constant dense<0.000000e+00> : vector<256x16xf32>
    %7 = tpu.matmul %1, %4, %cst {dimension_numbers = #tpu.dot_dimension_numbers<[1], [0], [0], [1], [0, 0, 1, 1], [], []>} : vector<256x256xbf16>, vector<256x16xbf16>, vector<256x16xf32> -> vector<256x16xf32>
    %8 = arith.truncf %7 : vector<256x16xf32> to vector<256x16xbf16>
    %c0_7 = arith.constant 0 : index
    %c0_8 = arith.constant 0 : index
    %9 = vector.load %arg3[%c0_7, %c0_8] : memref<16x16xbf16, #tpu.memory_space<vmem>>, vector<16x16xbf16>
    %cst_9 = arith.constant dense<0.000000e+00> : vector<256x16xf32>
    %10 = tpu.matmul %8, %9, %cst_9 {dimension_numbers = #tpu.dot_dimension_numbers<[1], [0], [0], [1], [0, 0, 1, 1], [], []>} : vector<256x16xbf16>, vector<16x16xbf16>, vector<256x16xf32> -> vector<256x16xf32>
    %11 = vector.shape_cast %10 : vector<256x16xf32> to vector<8x32x16xf32>
    %cst_10 = arith.constant dense<0.000000e+00> : vector<8x16xf32>
    %12 = vector.multi_reduction <add>, %11, %cst_10 [1] : vector<8x32x16xf32> to vector<8x16xf32>
    %13 = vector.shape_cast %12 : vector<8x16xf32> to vector<8x1x16xf32>
    %cst_11 = arith.constant 3.200000e+01 : f32
    %14 = vector.broadcast %cst_11 : f32 to vector<8x1x16xf32>
    %15 = arith.divf %13, %14 : vector<8x1x16xf32>
    %16 = vector.broadcast %15 : vector<8x1x16xf32> to vector<8x32x16xf32>
    %17 = arith.subf %11, %16 : vector<8x32x16xf32>
    %18 = arith.mulf %17, %17 : vector<8x32x16xf32>
    %cst_12 = arith.constant dense<0.000000e+00> : vector<8x16xf32>
    %19 = vector.multi_reduction <add>, %18, %cst_12 [1] : vector<8x32x16xf32> to vector<8x16xf32>
    %20 = vector.shape_cast %19 : vector<8x16xf32> to vector<8x1x16xf32>
    %cst_13 = arith.constant 3.200000e+01 : f32
    %21 = vector.broadcast %cst_13 : f32 to vector<8x1x16xf32>
    %22 = arith.divf %20, %21 : vector<8x1x16xf32>
    %23 = vector.broadcast %15 : vector<8x1x16xf32> to vector<8x32x16xf32>
    %24 = arith.subf %11, %23 : vector<8x32x16xf32>
    %cst_14 = arith.constant 9.99999974E-6 : f32
    %25 = vector.broadcast %cst_14 : f32 to vector<8x1x16xf32>
    %26 = arith.addf %22, %25 : vector<8x1x16xf32>
    %27 = math.rsqrt %26 : vector<8x1x16xf32>
    %28 = vector.broadcast %27 : vector<8x1x16xf32> to vector<8x32x16xf32>
    %29 = arith.mulf %24, %28 : vector<8x32x16xf32>
    %30 = vector.shape_cast %5 : vector<1x16xf32> to vector<1x1x16xf32>
    %31 = vector.broadcast %30 : vector<1x1x16xf32> to vector<8x32x16xf32>
    %32 = arith.mulf %29, %31 : vector<8x32x16xf32>
    %33 = vector.shape_cast %6 : vector<1x16xf32> to vector<1x1x16xf32>
    %34 = vector.broadcast %33 : vector<1x1x16xf32> to vector<8x32x16xf32>
    %35 = arith.addf %32, %34 : vector<8x32x16xf32>
    %cst_15 = arith.constant 0.000000e+00 : f32
    %36 = vector.broadcast %cst_15 : f32 to vector<8x32x16xf32>
    %37 = arith.maximumf %35, %36 : vector<8x32x16xf32>
    %38 = vector.shape_cast %37 : vector<8x32x16xf32> to vector<256x16xf32>
    %39 = arith.truncf %38 : vector<256x16xf32> to vector<256x16xbf16>
    %c0_16 = arith.constant 0 : index
    %c0_17 = arith.constant 0 : index
    %40 = vector.load %arg4[%c0_16, %c0_17] : memref<16x16xbf16, #tpu.memory_space<vmem>>, vector<16x16xbf16>
    %cst_18 = arith.constant dense<0.000000e+00> : vector<256x16xf32>
    %41 = tpu.matmul %39, %40, %cst_18 {dimension_numbers = #tpu.dot_dimension_numbers<[1], [0], [0], [1], [0, 0, 1, 1], [], []>} : vector<256x16xbf16>, vector<16x16xbf16>, vector<256x16xf32> -> vector<256x16xf32>
    %42 = vector.extract_strided_slice %2 {offsets = [2, 0], sizes = [1, 16], strides = [1, 1]} : vector<6x16xf32> to vector<1x16xf32>
    %43 = vector.broadcast %42 : vector<1x16xf32> to vector<256x16xf32>
    %44 = arith.addf %41, %43 : vector<256x16xf32>
    %cst_19 = arith.constant 0.000000e+00 : f32
    %45 = vector.broadcast %cst_19 : f32 to vector<256x16xf32>
    %46 = arith.maximumf %44, %45 : vector<256x16xf32>
    %47 = arith.truncf %46 : vector<256x16xf32> to vector<256x16xbf16>
    %48 = vector.extract_strided_slice %2 {offsets = [3, 0], sizes = [1, 16], strides = [1, 1]} : vector<6x16xf32> to vector<1x16xf32>
    %49 = vector.extract_strided_slice %2 {offsets = [4, 0], sizes = [1, 16], strides = [1, 1]} : vector<6x16xf32> to vector<1x16xf32>
    %cst_20 = arith.constant dense<0.000000e+00> : vector<256x16xf32>
    %50 = tpu.matmul %1, %47, %cst_20 {dimension_numbers = #tpu.dot_dimension_numbers<[1], [0], [0], [1], [0, 0, 1, 1], [], []>} : vector<256x256xbf16>, vector<256x16xbf16>, vector<256x16xf32> -> vector<256x16xf32>
    %51 = arith.truncf %50 : vector<256x16xf32> to vector<256x16xbf16>
    %c0_21 = arith.constant 0 : index
    %c0_22 = arith.constant 0 : index
    %52 = vector.load %arg5[%c0_21, %c0_22] : memref<16x16xbf16, #tpu.memory_space<vmem>>, vector<16x16xbf16>
    %cst_23 = arith.constant dense<0.000000e+00> : vector<256x16xf32>
    %53 = tpu.matmul %51, %52, %cst_23 {dimension_numbers = #tpu.dot_dimension_numbers<[1], [0], [0], [1], [0, 0, 1, 1], [], []>} : vector<256x16xbf16>, vector<16x16xbf16>, vector<256x16xf32> -> vector<256x16xf32>
    %54 = vector.shape_cast %53 : vector<256x16xf32> to vector<8x32x16xf32>
    %cst_24 = arith.constant dense<0.000000e+00> : vector<8x16xf32>
    %55 = vector.multi_reduction <add>, %54, %cst_24 [1] : vector<8x32x16xf32> to vector<8x16xf32>
    %56 = vector.shape_cast %55 : vector<8x16xf32> to vector<8x1x16xf32>
    %cst_25 = arith.constant 3.200000e+01 : f32
    %57 = vector.broadcast %cst_25 : f32 to vector<8x1x16xf32>
    %58 = arith.divf %56, %57 : vector<8x1x16xf32>
    %59 = vector.broadcast %58 : vector<8x1x16xf32> to vector<8x32x16xf32>
    %60 = arith.subf %54, %59 : vector<8x32x16xf32>
    %61 = arith.mulf %60, %60 : vector<8x32x16xf32>
    %cst_26 = arith.constant dense<0.000000e+00> : vector<8x16xf32>
    %62 = vector.multi_reduction <add>, %61, %cst_26 [1] : vector<8x32x16xf32> to vector<8x16xf32>
    %63 = vector.shape_cast %62 : vector<8x16xf32> to vector<8x1x16xf32>
    %cst_27 = arith.constant 3.200000e+01 : f32
    %64 = vector.broadcast %cst_27 : f32 to vector<8x1x16xf32>
    %65 = arith.divf %63, %64 : vector<8x1x16xf32>
    %66 = vector.broadcast %58 : vector<8x1x16xf32> to vector<8x32x16xf32>
    %67 = arith.subf %54, %66 : vector<8x32x16xf32>
    %cst_28 = arith.constant 9.99999974E-6 : f32
    %68 = vector.broadcast %cst_28 : f32 to vector<8x1x16xf32>
    %69 = arith.addf %65, %68 : vector<8x1x16xf32>
    %70 = math.rsqrt %69 : vector<8x1x16xf32>
    %71 = vector.broadcast %70 : vector<8x1x16xf32> to vector<8x32x16xf32>
    %72 = arith.mulf %67, %71 : vector<8x32x16xf32>
    %73 = vector.shape_cast %48 : vector<1x16xf32> to vector<1x1x16xf32>
    %74 = vector.broadcast %73 : vector<1x1x16xf32> to vector<8x32x16xf32>
    %75 = arith.mulf %72, %74 : vector<8x32x16xf32>
    %76 = vector.shape_cast %49 : vector<1x16xf32> to vector<1x1x16xf32>
    %77 = vector.broadcast %76 : vector<1x1x16xf32> to vector<8x32x16xf32>
    %78 = arith.addf %75, %77 : vector<8x32x16xf32>
    %cst_29 = arith.constant 0.000000e+00 : f32
    %79 = vector.broadcast %cst_29 : f32 to vector<8x32x16xf32>
    %80 = arith.maximumf %78, %79 : vector<8x32x16xf32>
    %cst_30 = arith.constant dense<0.000000e+00> : vector<8x16xf32>
    %81 = vector.multi_reduction <add>, %80, %cst_30 [1] : vector<8x32x16xf32> to vector<8x16xf32>
    %cst_31 = arith.constant 3.200000e+01 : f32
    %82 = vector.broadcast %cst_31 : f32 to vector<8x16xf32>
    %83 = arith.divf %81, %82 : vector<8x16xf32>
    %84 = arith.truncf %83 : vector<8x16xf32> to vector<8x16xbf16>
    %c0_32 = arith.constant 0 : index
    %c0_33 = arith.constant 0 : index
    %85 = vector.load %arg6[%c0_32, %c0_33] : memref<16x16xbf16, #tpu.memory_space<vmem>>, vector<16x16xbf16>
    %cst_34 = arith.constant dense<0.000000e+00> : vector<8x16xf32>
    %86 = tpu.matmul %84, %85, %cst_34 {dimension_numbers = #tpu.dot_dimension_numbers<[1], [0], [0], [1], [0, 0, 1, 1], [], []>} : vector<8x16xbf16>, vector<16x16xbf16>, vector<8x16xf32> -> vector<8x16xf32>
    %87 = vector.extract_strided_slice %2 {offsets = [5, 0], sizes = [1, 16], strides = [1, 1]} : vector<6x16xf32> to vector<1x16xf32>
    %88 = vector.broadcast %87 : vector<1x16xf32> to vector<8x16xf32>
    %89 = arith.addf %86, %88 : vector<8x16xf32>
    %c0_35 = arith.constant 0 : index
    %c0_36 = arith.constant 0 : index
    %c0_37 = arith.constant 0 : index
    %90 = vector.load %arg8[%c0_35, %c0_36, %c0_37] : memref<1x8x16xf32, #tpu.memory_space<vmem>>, vector<1x8x16xf32>
    %91 = vector.shape_cast %90 : vector<1x8x16xf32> to vector<8x16xf32>
    %92 = vector.shape_cast %89 : vector<8x16xf32> to vector<1x8x16xf32>
    tpu.vector_store %arg8[%c0_35, %c0_36, %c0_37], %92 {strides = array<i32>} : memref<1x8x16xf32, #tpu.memory_space<vmem>>, vector<1x8x16xf32>,
    return
  }
  func.func @transform_0(%arg0: i32) -> (i32, i32, i32) {
    %c0_i32 = arith.constant 0 : i32
    %c0_i32_0 = arith.constant 0 : i32
    %c0_i32_1 = arith.constant 0 : i32
    return %arg0, %c0_i32, %c0_i32_0 : i32, i32, i32
  }
  func.func @transform_1(%arg0: i32) -> (i32, i32, i32) {
    %c0_i32 = arith.constant 0 : i32
    %c0_i32_0 = arith.constant 0 : i32
    %c0_i32_1 = arith.constant 0 : i32
    return %arg0, %c0_i32, %c0_i32_0 : i32, i32, i32
  }
  func.func @transform_2(%arg0: i32) -> (i32, i32) {
    %c0_i32 = arith.constant 0 : i32
    %c0_i32_0 = arith.constant 0 : i32
    %c0_i32_1 = arith.constant 0 : i32
    return %c0_i32, %c0_i32_0 : i32, i32
  }
  func.func @transform_3(%arg0: i32) -> (i32, i32) {
    %c0_i32 = arith.constant 0 : i32
    %c0_i32_0 = arith.constant 0 : i32
    %c0_i32_1 = arith.constant 0 : i32
    return %c0_i32, %c0_i32_0 : i32, i32
  }
  func.func @transform_4(%arg0: i32) -> (i32, i32) {
    %c0_i32 = arith.constant 0 : i32
    %c0_i32_0 = arith.constant 0 : i32
    %c0_i32_1 = arith.constant 0 : i32
    return %c0_i32, %c0_i32_0 : i32, i32
  }
  func.func @transform_5(%arg0: i32) -> (i32, i32) {
    %c0_i32 = arith.constant 0 : i32
    %c0_i32_0 = arith.constant 0 : i32
    %c0_i32_1 = arith.constant 0 : i32
    return %c0_i32, %c0_i32_0 : i32, i32
  }
  func.func @transform_6(%arg0: i32) -> (i32, i32) {
    %c0_i32 = arith.constant 0 : i32
    %c0_i32_0 = arith.constant 0 : i32
    %c0_i32_1 = arith.constant 0 : i32
    return %c0_i32, %c0_i32_0 : i32, i32
  }
  func.func @transform_7(%arg0: i32) -> (i32, i32, i32) {
    %c0_i32 = arith.constant 0 : i32
    %c0_i32_0 = arith.constant 0 : i32
    %c0_i32_1 = arith.constant 0 : i32
    return %arg0, %c0_i32, %c0_i32_0 : i32, i32, i32
  }
}

</mosaic_0001>

<llo_original>
// kernel: tpu_custom_call.1
$region0: #{tpu_custom_call.1}
  #allocation0 [shape = 'u32[]', space=smem, size = 0x4, offset = 0x4, fixed_abs, tag = 'smem constant byte address 0x4 - core index']
  #allocation1 [shape = 'u32[144,128]{1,0:T(1,128)}', space=vmem, size = 0x12000, scoped, tag = 'internal scratch']
  %s0 = inlined_call_operand.hbm [shape: bf16[2,256,256], index: 0, kind: input, shape index: {}]
  %s1 = inlined_call_operand.vmem [shape: bf16[2,256,16], index: 1, kind: input, shape index: {}]
  %s2 = inlined_call_operand.vmem [shape: bf16[16,16], index: 2, kind: input, shape index: {}]
  %s3 = inlined_call_operand.vmem [shape: bf16[16,16], index: 3, kind: input, shape index: {}]
  %s4 = inlined_call_operand.vmem [shape: bf16[16,16], index: 4, kind: input, shape index: {}]
  %s5 = inlined_call_operand.vmem [shape: bf16[16,16], index: 5, kind: input, shape index: {}]
  %s6 = inlined_call_operand.vmem [shape: f32[6,16], index: 6, kind: input, shape index: {}]
  %s7 = inlined_call_operand.hbm [shape: f32[2,8,16], index: 7, kind: output, shape index: {}]
  %s8 = sld [smem:[#allocation0]]
  $region65: #{tpu_custom_call.1} parent=0
    _
  %s10 = ssub.s32 1, %s8
  %s11 = scalar_select 0, %s10, %s8
  $region1: #{tpu_custom_call.1} parent=0
    #allocation2 [shape = 'u8[262144]{0}', space=vmem, size = 0x40000, scoped, tag = 'input window, operand 0']
    #allocation3 [shape = 's32[2]{0}', space=sflag, size = 0x8, scoped, tag = 'scoped memory for tpu_custom_call.1']
    #allocation4 [shape = 's32[2]{0}', space=sflag, size = 0x8, scoped, tag = 'scoped memory for tpu_custom_call.1']
    #allocation5 [shape = 'u8[8192]{0}', space=vmem, size = 0x2000, scoped, tag = 'output window, operand 0']
    %12 = vsyncpa [#allocation3], 0
    %s13 = scalar_lea.sflag [#allocation3], 1
    %14 = vsyncpa %s13, 0
    %15 = vsyncpa [#allocation4], 0
    %s16 = scalar_lea.sflag [#allocation4], 1
    %17 = vsyncpa %s16, 0
    loop: start=0, step=1, limit=4
    $region2: #{tpu_custom_call.1} parent=1 // loop_pre_header
      _
    $region3: #{tpu_custom_call.1} parent=1 // loop_header
      %s19 = sphi 0, %s23
      %p20 = scmp.ge.s32.totalorder %s19, 4
      %s29 = sphi 0, %s31
      %s32 = sphi 0, %s29
      %s33 = sphi 0, %s32
      %s49 = sphi 0, %s33
      %s55 = sphi 0, %s57
      %s58 = sphi 0, %s55
      %s59 = sphi 0, %s58
      %s75 = sphi 0, %s59
      %s79 = sphi 0, %s79
      %s81 = sphi 0, %s79
      %s82 = sphi 0, %s81
      %s96 = sphi 0, %s82
      %s100 = sphi 0, %s100
      %s102 = sphi 0, %s100
      %s103 = sphi 0, %s102
      %s117 = sphi 0, %s103
      %s121 = sphi 0, %s121
      %s123 = sphi 0, %s121
      %s124 = sphi 0, %s123
      %s138 = sphi 0, %s124
      %s142 = sphi 0, %s142
      %s144 = sphi 0, %s142
      %s145 = sphi 0, %s144
      %s159 = sphi 0, %s145
      %s163 = sphi 0, %s163
      %s165 = sphi 0, %s163
      %s166 = sphi 0, %s165
      %s180 = sphi 0, %s166
      %s186 = sphi 0, %s188
      %s189 = sphi 0, %s186
      %s190 = sphi 0, %s189
      %s206 = sphi 0, %s190
    $region4: #{tpu_custom_call.1} parent=1 // loop_header_branch
      %22 = sbr.rel (%p20) target = $region8
    $region5: #{tpu_custom_call.1} parent=1 // loop_body
      %s24 = ssub.s32 %s19, 1
      %s25 = ssub.s32 %s19, 2
      %s26 = sadd.s32 %s19, 1
      %s27 = ssub.s32 %s19, %s26
      %p28 = scmp.eq.s32.totalorder %s27, 0
      %s30 = sadd.s32 %s29, 1
      %s31 = scalar_select %p28, %s29, %s30
      %p34 = pneg %p28
      %p35 = scmp.eq.s32.totalorder %s19, 1
      %p36 = por %p34, %p35
      %p37 = scmp.ne.s32.totalorder %s29, %s32
      %p38 = scmp.eq.s32.totalorder %s19, 0
      %p39 = por %p37, %p38
      %p40 = scmp.ne.s32.totalorder %s29, %s32
      %p41 = scmp.eq.s32.totalorder %s24, 1
      %p42 = por %p40, %p41
      %p43 = scmp.ne.s32.totalorder %s32, %s33
      %p44 = scmp.eq.s32.totalorder %s24, 0
      %p45 = por %p43, %p44
      %p46 = scmp.ne.s32.totalorder %s32, %s33
      %p47 = scmp.eq.s32.totalorder %s25, 1
      %p48 = por %p46, %p47
      %p50 = scmp.ne.s32.totalorder %s33, %s49
      %p51 = scmp.eq.s32.totalorder %s25, 0
      %p52 = por %p50, %p51
      %s53 = ssub.s32 %s19, %s26
      %p54 = scmp.eq.s32.totalorder %s53, 0
      %s56 = sadd.s32 %s55, 1
      %s57 = scalar_select %p54, %s55, %s56
      %p60 = pneg %p54
      %p61 = scmp.eq.s32.totalorder %s19, 1
      %p62 = por %p60, %p61
      %p63 = scmp.ne.s32.totalorder %s55, %s58
      %p64 = scmp.eq.s32.totalorder %s19, 0
      %p65 = por %p63, %p64
      %p66 = scmp.ne.s32.totalorder %s55, %s58
      %p67 = scmp.eq.s32.totalorder %s24, 1
      %p68 = por %p66, %p67
      %p69 = scmp.ne.s32.totalorder %s58, %s59
      %p70 = scmp.eq.s32.totalorder %s24, 0
      %p71 = por %p69, %p70
      %p72 = scmp.ne.s32.totalorder %s58, %s59
      %p73 = scmp.eq.s32.totalorder %s25, 1
      %p74 = por %p72, %p73
      %p76 = scmp.ne.s32.totalorder %s59, %s75
      %p77 = scmp.eq.s32.totalorder %s25, 0
      %p78 = por %p76, %p77
      %s80 = sadd.s32 %s79, 1
      %p83 = scmp.eq.s32.totalorder %s19, 1
      %p84 = scmp.ne.s32.totalorder %s79, %s81
      %p85 = scmp.eq.s32.totalorder %s19, 0
      %p86 = por %p84, %p85
      %p87 = scmp.ne.s32.totalorder %s79, %s81
      %p88 = scmp.eq.s32.totalorder %s24, 1
      %p89 = por %p87, %p88
      %p90 = scmp.ne.s32.totalorder %s81, %s82
      %p91 = scmp.eq.s32.totalorder %s24, 0
      %p92 = por %p90, %p91
      %p93 = scmp.ne.s32.totalorder %s81, %s82
      %p94 = scmp.eq.s32.totalorder %s25, 1
      %p95 = por %p93, %p94
      %p97 = scmp.ne.s32.totalorder %s82, %s96
      %p98 = scmp.eq.s32.totalorder %s25, 0
      %p99 = por %p97, %p98
      %s101 = sadd.s32 %s100, 1
      %p104 = scmp.eq.s32.totalorder %s19, 1
      %p105 = scmp.ne.s32.totalorder %s100, %s102
      %p106 = scmp.eq.s32.totalorder %s19, 0
      %p107 = por %p105, %p106
      %p108 = scmp.ne.s32.totalorder %s100, %s102
      %p109 = scmp.eq.s32.totalorder %s24, 1
      %p110 = por %p108, %p109
      %p111 = scmp.ne.s32.totalorder %s102, %s103
      %p112 = scmp.eq.s32.totalorder %s24, 0
      %p113 = por %p111, %p112
      %p114 = scmp.ne.s32.totalorder %s102, %s103
      %p115 = scmp.eq.s32.totalorder %s25, 1
      %p116 = por %p114, %p115
      %p118 = scmp.ne.s32.totalorder %s103, %s117
      %p119 = scmp.eq.s32.totalorder %s25, 0
      %p120 = por %p118, %p119
      %s122 = sadd.s32 %s121, 1
      %p125 = scmp.eq.s32.totalorder %s19, 1
      %p126 = scmp.ne.s32.totalorder %s121, %s123
      %p127 = scmp.eq.s32.totalorder %s19, 0
      %p128 = por %p126, %p127
      %p129 = scmp.ne.s32.totalorder %s121, %s123
      %p130 = scmp.eq.s32.totalorder %s24, 1
      %p131 = por %p129, %p130
      %p132 = scmp.ne.s32.totalorder %s123, %s124
      %p133 = scmp.eq.s32.totalorder %s24, 0
      %p134 = por %p132, %p133
      %p135 = scmp.ne.s32.totalorder %s123, %s124
      %p136 = scmp.eq.s32.totalorder %s25, 1
      %p137 = por %p135, %p136
      %p139 = scmp.ne.s32.totalorder %s124, %s138
      %p140 = scmp.eq.s32.totalorder %s25, 0
      %p141 = por %p139, %p140
      %s143 = sadd.s32 %s142, 1
      %p146 = scmp.eq.s32.totalorder %s19, 1
      %p147 = scmp.ne.s32.totalorder %s142, %s144
      %p148 = scmp.eq.s32.totalorder %s19, 0
      %p149 = por %p147, %p148
      %p150 = scmp.ne.s32.totalorder %s142, %s144
      %p151 = scmp.eq.s32.totalorder %s24, 1
      %p152 = por %p150, %p151
      %p153 = scmp.ne.s32.totalorder %s144, %s145
      %p154 = scmp.eq.s32.totalorder %s24, 0
      %p155 = por %p153, %p154
      %p156 = scmp.ne.s32.totalorder %s144, %s145
      %p157 = scmp.eq.s32.totalorder %s25, 1
      %p158 = por %p156, %p157
      %p160 = scmp.ne.s32.totalorder %s145, %s159
      %p161 = scmp.eq.s32.totalorder %s25, 0
      %p162 = por %p160, %p161
      %s164 = sadd.s32 %s163, 1
      %p167 = scmp.eq.s32.totalorder %s19, 1
      %p168 = scmp.ne.s32.totalorder %s163, %s165
      %p169 = scmp.eq.s32.totalorder %s19, 0
      %p170 = por %p168, %p169
      %p171 = scmp.ne.s32.totalorder %s163, %s165
      %p172 = scmp.eq.s32.totalorder %s24, 1
      %p173 = por %p171, %p172
      %p174 = scmp.ne.s32.totalorder %s165, %s166
      %p175 = scmp.eq.s32.totalorder %s24, 0
      %p176 = por %p174, %p175
      %p177 = scmp.ne.s32.totalorder %s165, %s166
      %p178 = scmp.eq.s32.totalorder %s25, 1
      %p179 = por %p177, %p178
      %p181 = scmp.ne.s32.totalorder %s166, %s180
      %p182 = scmp.eq.s32.totalorder %s25, 0
      %p183 = por %p181, %p182
      %s184 = ssub.s32 %s19, %s26
      %p185 = scmp.eq.s32.totalorder %s184, 0
      %s187 = sadd.s32 %s186, 1
      %s188 = scalar_select %p185, %s186, %s187
      %p191 = pneg %p185
      %p192 = scmp.eq.s32.totalorder %s19, 1
      %p193 = por %p191, %p192
      %p194 = scmp.ne.s32.totalorder %s186, %s189
      %p195 = scmp.eq.s32.totalorder %s19, 0
      %p196 = por %p194, %p195
      %p197 = scmp.ne.s32.totalorder %s186, %s189
      %p198 = scmp.eq.s32.totalorder %s24, 1
      %p199 = por %p197, %p198
      %p200 = scmp.ne.s32.totalorder %s189, %s190
      %p201 = scmp.eq.s32.totalorder %s24, 0
      %p202 = por %p200, %p201
      %p203 = scmp.ne.s32.totalorder %s189, %s190
      %p204 = scmp.eq.s32.totalorder %s25, 1
      %p205 = por %p203, %p204
      %p207 = scmp.ne.s32.totalorder %s190, %s206
      %p208 = scmp.eq.s32.totalorder %s25, 0
      %p209 = por %p207, %p208
      %p210 = scmp.le.s32.totalorder 1, %s19
      %p211 = scmp.lt.s32.totalorder %s19, 3
      %p212 = pnand %p210, %p211
      %p213 = pneg %p212
      // Predicated region
      $region9: #{tpu_custom_call.1} parent=5 // pred_check
        _
      $region10: #{tpu_custom_call.1} parent=5 // pred_check_branch
        %215 = sbr.rel (%p212) target = $region12
      $region11: #{tpu_custom_call.1} parent=5 // pred_region
        %s216 = ssub.s32 %s19, 1
        // Predicated region
        $region13: #{tpu_custom_call.1} parent=11 // pred_check
          %p217 = pneg %p92
        $region14: #{tpu_custom_call.1} parent=11 // pred_check_branch
          %219 = sbr.rel (%p217) target = $region16
        $region15: #{tpu_custom_call.1} parent=11 // pred_region
          _
        $region16: #{tpu_custom_call.1} parent=11 // pred_fallthru
          _
        // Predicated region
        $region17: #{tpu_custom_call.1} parent=11 // pred_check
          %p220 = pneg %p113
        $region18: #{tpu_custom_call.1} parent=11 // pred_check_branch
          %222 = sbr.rel (%p220) target = $region20
        $region19: #{tpu_custom_call.1} parent=11 // pred_region
          _
        $region20: #{tpu_custom_call.1} parent=11 // pred_fallthru
          _
        // Predicated region
        $region21: #{tpu_custom_call.1} parent=11 // pred_check
          %p223 = pneg %p134
        $region22: #{tpu_custom_call.1} parent=11 // pred_check_branch
          %225 = sbr.rel (%p223) target = $region24
        $region23: #{tpu_custom_call.1} parent=11 // pred_region
          _
        $region24: #{tpu_custom_call.1} parent=11 // pred_fallthru
          _
        // Predicated region
        $region25: #{tpu_custom_call.1} parent=11 // pred_check
          %p226 = pneg %p155
        $region26: #{tpu_custom_call.1} parent=11 // pred_check_branch
          %228 = sbr.rel (%p226) target = $region28
        $region27: #{tpu_custom_call.1} parent=11 // pred_region
          _
        $region28: #{tpu_custom_call.1} parent=11 // pred_fallthru
          _
        // Predicated region
        $region29: #{tpu_custom_call.1} parent=11 // pred_check
          %p229 = pneg %p176
        $region30: #{tpu_custom_call.1} parent=11 // pred_check_branch
          %231 = sbr.rel (%p229) target = $region32
        $region31: #{tpu_custom_call.1} parent=11 // pred_region
          _
        $region32: #{tpu_custom_call.1} parent=11 // pred_fallthru
          _
      $region12: #{tpu_custom_call.1} parent=5 // pred_fallthru
        _
      %p232 = scmp.lt.s32.totalorder %s19, 2
      // Predicated region
      $region33: #{tpu_custom_call.1} parent=5 // pred_check
        %p233 = pneg %p232
      $region34: #{tpu_custom_call.1} parent=5 // pred_check_branch
        %235 = sbr.rel (%p233) target = $region36
      $region35: #{tpu_custom_call.1} parent=5 // pred_region
        // Predicated region
        $region37: #{tpu_custom_call.1} parent=35 // pred_check
          %p236 = pneg %p39
        $region38: #{tpu_custom_call.1} parent=35 // pred_check_branch
          %238 = sbr.rel (%p236) target = $region40
        $region39: #{tpu_custom_call.1} parent=35 // pred_region
          %s239 = sand.u32 %s29, 1
          %s240 = scalar_lea.sflag [#allocation3], %s239
          %s241 = sand.u32 %s29, 1
          %s242 = smul.addr %s241, 256
          %s243 = scalar_lea.vmem [#allocation2], %s242
          %s245 = ssub.s32 4096, 4096
          %246 = vsyncadd %s240, %s245
          %s247 = smul.addr %s19, 64
          %s248 = smul.addr %s247, 64
          %s249 = scalar_lea.hbm %s0, %s248
          %s250 = sshll.u32 %s243, 4
          %s251 = int_to_ptr.vmem [resolvable:$true] %s250
          %256 = dma.hbm_to_vmem [thread:$0]  %s249, 4096, %s251, %s240, 128, 128, 8
        $region40: #{tpu_custom_call.1} parent=35 // pred_fallthru
          _
        // Predicated region
        $region41: #{tpu_custom_call.1} parent=35 // pred_check
          %p257 = pneg %p65
        $region42: #{tpu_custom_call.1} parent=35 // pred_check_branch
          %259 = sbr.rel (%p257) target = $region44
        $region43: #{tpu_custom_call.1} parent=35 // pred_region
          %p260 = scmp.lt.s32.totalorder %s19, 1
          %s261 = scalar_select %p260, %s19, 1
          %s262 = smul.addr %s261, 32
          %s263 = smul.addr %s262, 4
          %s264 = scalar_lea.vmem %s1, %s263
        $region44: #{tpu_custom_call.1} parent=35 // pred_fallthru
          _
      $region36: #{tpu_custom_call.1} parent=5 // pred_fallthru
        _
      %p265 = scmp.le.s32.totalorder 1, %s19
      %p266 = scmp.lt.s32.totalorder %s19, 3
      %p267 = pnand %p265, %p266
      %p268 = pneg %p267
      // Predicated region
      $region45: #{tpu_custom_call.1} parent=5 // pred_check
        _
      $region46: #{tpu_custom_call.1} parent=5 // pred_check_branch
        %270 = sbr.rel (%p267) target = $region48
      $region47: #{tpu_custom_call.1} parent=5 // pred_region
        %s271 = ssub.s32 %s19, 1
        %s272 = sand.u32 %s32, 1
        %s273 = scalar_lea.sflag [#allocation3], %s272
        %s274 = sand.u32 %s32, 1
        %s275 = smul.addr %s274, 256
        %s276 = scalar_lea.vmem [#allocation2], %s275
        // Predicated region
        $region49: #{tpu_custom_call.1} parent=47 // pred_check
          %p277 = pneg %p45
        $region50: #{tpu_custom_call.1} parent=47 // pred_check_branch
          %279 = sbr.rel (%p277) target = $region52
        $region51: #{tpu_custom_call.1} parent=47 // pred_region
          %280 = dma.done %s273, 4096
        $region52: #{tpu_custom_call.1} parent=47 // pred_fallthru
          _
        %s281 = sand.u32 %s32, 1
        %s282 = scalar_lea.sflag [#allocation3], %s281
        %s283 = sand.u32 %s32, 1
        %s284 = smul.addr %s283, 256
        %s285 = scalar_lea.vmem [#allocation2], %s284
        %p286 = pneg %p45
        %p287 = pneg %p42
        %p288 = scmp.lt.s32.totalorder %s24, 1
        %s289 = scalar_select %p288, %s24, 1
        %s290 = smul.addr %s289, 32
        %s291 = smul.addr %s290, 4
        %s292 = scalar_lea.vmem %s1, %s291
        %p293 = pneg %p71
        %p294 = pneg %p68
        %p295 = pneg %p92
        %p296 = pneg %p89
        %p297 = pneg %p113
        %p298 = pneg %p110
        %p299 = pneg %p134
        %p300 = pneg %p131
        %p301 = pneg %p155
        %p302 = pneg %p152
        %p303 = pneg %p176
        %p304 = pneg %p173
        %p305 = pneg %p202
        %p306 = pneg %p199
        %s307 = sand.u32 %s189, 1
        %s308 = scalar_lea.sflag [#allocation4], %s307
        %s309 = sand.u32 %s189, 1
        %s310 = smul.addr %s309, 8
        %s311 = scalar_lea.vmem [#allocation5], %s310
        %p312 = scmp.lt.s32.totalorder %s24, 1
        %s313 = scalar_select %p312, %s24, 1
        %s314 = smul.addr %s313, 32
        %s315 = smul.addr %s314, 4
        %s316 = scalar_lea.vmem %s1, %s315
        %v318 = vld [vmem:[%s276] sm:$0xff]
        %v319 = vld [vmem:[%s276 + $0x8] sm:$0xff]
        %v320 = vld [vmem:[%s276 + $0x10] sm:$0xff]
        %v321 = vld [vmem:[%s276 + $0x18] sm:$0xff]
        %v322 = vld [vmem:[%s276 + $0x20] sm:$0xff]
        %v323 = vld [vmem:[%s276 + $0x28] sm:$0xff]
        %v324 = vld [vmem:[%s276 + $0x30] sm:$0xff]
        %v325 = vld [vmem:[%s276 + $0x38] sm:$0xff]
        %v326 = vld [vmem:[%s276 + $0x40] sm:$0xff]
        %v327 = vld [vmem:[%s276 + $0x48] sm:$0xff]
        %v328 = vld [vmem:[%s276 + $0x50] sm:$0xff]
        %v329 = vld [vmem:[%s276 + $0x58] sm:$0xff]
        %v330 = vld [vmem:[%s276 + $0x60] sm:$0xff]
        %v331 = vld [vmem:[%s276 + $0x68] sm:$0xff]
        %v332 = vld [vmem:[%s276 + $0x70] sm:$0xff]
        %v333 = vld [vmem:[%s276 + $0x78] sm:$0xff]
        %v334 = vld [vmem:[%s276 + $0x80] sm:$0xff]
        %v335 = vld [vmem:[%s276 + $0x88] sm:$0xff]
        %v336 = vld [vmem:[%s276 + $0x90] sm:$0xff]
        %v337 = vld [vmem:[%s276 + $0x98] sm:$0xff]
        %v338 = vld [vmem:[%s276 + $0xa0] sm:$0xff]
        %v339 = vld [vmem:[%s276 + $0xa8] sm:$0xff]
        %v340 = vld [vmem:[%s276 + $0xb0] sm:$0xff]
        %v341 = vld [vmem:[%s276 + $0xb8] sm:$0xff]
        %v342 = vld [vmem:[%s276 + $0xc0] sm:$0xff]
        %v343 = vld [vmem:[%s276 + $0xc8] sm:$0xff]
        %v344 = vld [vmem:[%s276 + $0xd0] sm:$0xff]
        %v345 = vld [vmem:[%s276 + $0xd8] sm:$0xff]
        %v346 = vld [vmem:[%s276 + $0xe0] sm:$0xff]
        %v347 = vld [vmem:[%s276 + $0xe8] sm:$0xff]
        %v348 = vld [vmem:[%s276 + $0xf0] sm:$0xff]
        %v349 = vld [vmem:[%s276 + $0xf8] sm:$0xff]
        %v350 = vld [vmem:[%s6] sm:$0x3f]
        %v351 = vld [vmem:[%s316] sm:$0xf]
        %v352 = vld [vmem:[%s316 + $0x4] sm:$0xf]
        %v353 = vld [vmem:[%s316 + $0x8] sm:$0xf]
        %v354 = vld [vmem:[%s316 + $0xc] sm:$0xf]
        %v355 = vld [vmem:[%s316 + $0x10] sm:$0xf]
        %v356 = vld [vmem:[%s316 + $0x14] sm:$0xf]
        %v357 = vld [vmem:[%s316 + $0x18] sm:$0xf]
        %v358 = vld [vmem:[%s316 + $0x1c] sm:$0xf]
        %v359 = vld [vmem:[%s316 + $0x20] sm:$0xf]
        %v360 = vld [vmem:[%s316 + $0x24] sm:$0xf]
        %v361 = vld [vmem:[%s316 + $0x28] sm:$0xf]
        %v362 = vld [vmem:[%s316 + $0x2c] sm:$0xf]
        %v363 = vld [vmem:[%s316 + $0x30] sm:$0xf]
        %v364 = vld [vmem:[%s316 + $0x34] sm:$0xf]
        %v365 = vld [vmem:[%s316 + $0x38] sm:$0xf]
        %v366 = vld [vmem:[%s316 + $0x3c] sm:$0xf]
        %v367 = vld [vmem:[%s316 + $0x40] sm:$0xf]
        %v368 = vld [vmem:[%s316 + $0x44] sm:$0xf]
        %v369 = vld [vmem:[%s316 + $0x48] sm:$0xf]
        %v370 = vld [vmem:[%s316 + $0x4c] sm:$0xf]
        %v371 = vld [vmem:[%s316 + $0x50] sm:$0xf]
        %v372 = vld [vmem:[%s316 + $0x54] sm:$0xf]
        %v373 = vld [vmem:[%s316 + $0x58] sm:$0xf]
        %v374 = vld [vmem:[%s316 + $0x5c] sm:$0xf]
        %v375 = vld [vmem:[%s316 + $0x60] sm:$0xf]
        %v376 = vld [vmem:[%s316 + $0x64] sm:$0xf]
        %v377 = vld [vmem:[%s316 + $0x68] sm:$0xf]
        %v378 = vld [vmem:[%s316 + $0x6c] sm:$0xf]
        %v379 = vld [vmem:[%s316 + $0x70] sm:$0xf]
        %v380 = vld [vmem:[%s316 + $0x74] sm:$0xf]
        %v381 = vld [vmem:[%s316 + $0x78] sm:$0xf]
        %v382 = vld [vmem:[%s316 + $0x7c] sm:$0xf]
        %v415 = vunpack.c.l.b16 %v318
        %v416 = vunpack.c.h.b16 %v318
        %v417 = vunpack.c.l.b16 %v319
        %v418 = vunpack.c.h.b16 %v319
        %v419 = vunpack.c.l.b16 %v320
        %v420 = vunpack.c.h.b16 %v320
        %v421 = vunpack.c.l.b16 %v321
        %v422 = vunpack.c.h.b16 %v321
        %v423 = vunpack.c.l.b16 %v322
        %v424 = vunpack.c.h.b16 %v322
        %v425 = vunpack.c.l.b16 %v323
        %v426 = vunpack.c.h.b16 %v323
        %v427 = vunpack.c.l.b16 %v324
        %v428 = vunpack.c.h.b16 %v324
        %v429 = vunpack.c.l.b16 %v325
        %v430 = vunpack.c.h.b16 %v325
        %v431 = vunpack.c.l.b16 %v326
        %v432 = vunpack.c.h.b16 %v326
        %v433 = vunpack.c.l.b16 %v327
        %v434 = vunpack.c.h.b16 %v327
        %v435 = vunpack.c.l.b16 %v328
        %v436 = vunpack.c.h.b16 %v328
        %v437 = vunpack.c.l.b16 %v329
        %v438 = vunpack.c.h.b16 %v329
        %v439 = vunpack.c.l.b16 %v330
        %v440 = vunpack.c.h.b16 %v330
        %v441 = vunpack.c.l.b16 %v331
        %v442 = vunpack.c.h.b16 %v331
        %v443 = vunpack.c.l.b16 %v332
        %v444 = vunpack.c.h.b16 %v332
        %v445 = vunpack.c.l.b16 %v333
        %v446 = vunpack.c.h.b16 %v333
        %v447 = vunpack.c.l.b16 %v334
        %v448 = vunpack.c.h.b16 %v334
        %v449 = vunpack.c.l.b16 %v335
        %v450 = vunpack.c.h.b16 %v335
        %v451 = vunpack.c.l.b16 %v336
        %v452 = vunpack.c.h.b16 %v336
        %v453 = vunpack.c.l.b16 %v337
        %v454 = vunpack.c.h.b16 %v337
        %v455 = vunpack.c.l.b16 %v338
        %v456 = vunpack.c.h.b16 %v338
        %v457 = vunpack.c.l.b16 %v339
        %v458 = vunpack.c.h.b16 %v339
        %v459 = vunpack.c.l.b16 %v340
        %v460 = vunpack.c.h.b16 %v340
        %v461 = vunpack.c.l.b16 %v341
        %v462 = vunpack.c.h.b16 %v341
        %v463 = vunpack.c.l.b16 %v342
        %v464 = vunpack.c.h.b16 %v342
        %v465 = vunpack.c.l.b16 %v343
        %v466 = vunpack.c.h.b16 %v343
        %v467 = vunpack.c.l.b16 %v344
        %v468 = vunpack.c.h.b16 %v344
        %v469 = vunpack.c.l.b16 %v345
        %v470 = vunpack.c.h.b16 %v345
        %v471 = vunpack.c.l.b16 %v346
        %v472 = vunpack.c.h.b16 %v346
        %v473 = vunpack.c.l.b16 %v347
        %v474 = vunpack.c.h.b16 %v347
        %v475 = vunpack.c.l.b16 %v348
        %v476 = vunpack.c.h.b16 %v348
        %v477 = vunpack.c.l.b16 %v349
        %v478 = vunpack.c.h.b16 %v349
        %v479 = vpack.c.b16 %v417, %v415
        %v480 = vpack.c.b16 %v418, %v416
        %v481 = vpack.c.b16 %v421, %v419
        %v482 = vpack.c.b16 %v422, %v420
        %v483 = vpack.c.b16 %v425, %v423
        %v484 = vpack.c.b16 %v426, %v424
        %v485 = vpack.c.b16 %v429, %v427
        %v486 = vpack.c.b16 %v430, %v428
        %v487 = vpack.c.b16 %v433, %v431
        %v488 = vpack.c.b16 %v434, %v432
        %v489 = vpack.c.b16 %v437, %v435
        %v490 = vpack.c.b16 %v438, %v436
        %v491 = vpack.c.b16 %v441, %v439
        %v492 = vpack.c.b16 %v442, %v440
        %v493 = vpack.c.b16 %v445, %v443
        %v494 = vpack.c.b16 %v446, %v444
        %v495 = vpack.c.b16 %v449, %v447
        %v496 = vpack.c.b16 %v450, %v448
        %v497 = vpack.c.b16 %v453, %v451
        %v498 = vpack.c.b16 %v454, %v452
        %v499 = vpack.c.b16 %v457, %v455
        %v500 = vpack.c.b16 %v458, %v456
        %v501 = vpack.c.b16 %v461, %v459
        %v502 = vpack.c.b16 %v462, %v460
        %v503 = vpack.c.b16 %v465, %v463
        %v504 = vpack.c.b16 %v466, %v464
        %v505 = vpack.c.b16 %v469, %v467
        %v506 = vpack.c.b16 %v470, %v468
        %v507 = vpack.c.b16 %v473, %v471
        %v508 = vpack.c.b16 %v474, %v472
        %v509 = vpack.c.b16 %v477, %v475
        %v510 = vpack.c.b16 %v478, %v476
        %v575 = vunpack.c.l.b16 %v351
        %v576 = vunpack.c.l.b16 %v352
        %v577 = vunpack.c.l.b16 %v353
        %v578 = vunpack.c.l.b16 %v354
        %v579 = vunpack.c.l.b16 %v355
        %v580 = vunpack.c.l.b16 %v356
        %v581 = vunpack.c.l.b16 %v357
        %v582 = vunpack.c.l.b16 %v358
        %v583 = vunpack.c.l.b16 %v359
        %v584 = vunpack.c.l.b16 %v360
        %v585 = vunpack.c.l.b16 %v361
        %v586 = vunpack.c.l.b16 %v362
        %v587 = vunpack.c.l.b16 %v363
        %v588 = vunpack.c.l.b16 %v364
        %v589 = vunpack.c.l.b16 %v365
        %v590 = vunpack.c.l.b16 %v366
        %v591 = vunpack.c.l.b16 %v367
        %v592 = vunpack.c.l.b16 %v368
        %v593 = vunpack.c.l.b16 %v369
        %v594 = vunpack.c.l.b16 %v370
        %v595 = vunpack.c.l.b16 %v371
        %v596 = vunpack.c.l.b16 %v372
        %v597 = vunpack.c.l.b16 %v373
        %v598 = vunpack.c.l.b16 %v374
        %v599 = vunpack.c.l.b16 %v375
        %v600 = vunpack.c.l.b16 %v376
        %v601 = vunpack.c.l.b16 %v377
        %v602 = vunpack.c.l.b16 %v378
        %v603 = vunpack.c.l.b16 %v379
        %v604 = vunpack.c.l.b16 %v380
        %v605 = vunpack.c.l.b16 %v381
        %v606 = vunpack.c.l.b16 %v382
        %v607 = vpack.c.b16 %v576, %v575
        %v608 = vpack.c.b16 %v578, %v577
        %v609 = vpack.c.b16 %v580, %v579
        %v610 = vpack.c.b16 %v582, %v581
        %v611 = vpack.c.b16 %v584, %v583
        %v612 = vpack.c.b16 %v586, %v585
        %v613 = vpack.c.b16 %v588, %v587
        %v614 = vpack.c.b16 %v590, %v589
        %v615 = vpack.c.b16 %v592, %v591
        %v616 = vpack.c.b16 %v594, %v593
        %v617 = vpack.c.b16 %v596, %v595
        %v618 = vpack.c.b16 %v598, %v597
        %v619 = vpack.c.b16 %v600, %v599
        %v620 = vpack.c.b16 %v602, %v601
        %v621 = vpack.c.b16 %v604, %v603
        %v622 = vpack.c.b16 %v606, %v605
        %639 = vmatprep.subr.bf16.mxu0 0
        %640 = vmatpush1.bf16.msra.mxu0 %v607
        %641 = vmatprep.subr.bf16.mxu0 0
        %642 = vmatpush1.bf16.msra.mxu0 %v608
        %643 = vmatprep.subr.bf16.mxu0 0
        %644 = vmatpush1.bf16.msra.mxu0 %v609
        %645 = vmatprep.subr.bf16.mxu0 0
        %646 = vmatpush1.bf16.msra.mxu0 %v610
        %647 = vmatprep.subr.bf16.mxu0 0
        %648 = vmatpush1.bf16.msra.mxu0 %v611
        %649 = vmatprep.subr.bf16.mxu0 0
        %650 = vmatpush1.bf16.msra.mxu0 %v612
        %651 = vmatprep.subr.bf16.mxu0 0
        %652 = vmatpush1.bf16.msra.mxu0 %v613
        %653 = vmatprep.subr.bf16.mxu0 0
        %654 = vmatpush1.bf16.msra.mxu0 %v614
        %655 = vmatprep.subr.bf16.mxu0 0
        %656 = vmatpush1.bf16.msra.mxu0 %v615
        %657 = vmatprep.subr.bf16.mxu0 0
        %658 = vmatpush1.bf16.msra.mxu0 %v616
        %659 = vmatprep.subr.bf16.mxu0 0
        %660 = vmatpush1.bf16.msra.mxu0 %v617
        %661 = vmatprep.subr.bf16.mxu0 0
        %662 = vmatpush1.bf16.msra.mxu0 %v618
        %663 = vmatprep.subr.bf16.mxu0 0
        %664 = vmatpush1.bf16.msra.mxu0 %v619
        %665 = vmatprep.subr.bf16.mxu0 0
        %666 = vmatpush1.bf16.msra.mxu0 %v620
        %667 = vmatprep.subr.bf16.mxu0 0
        %668 = vmatpush1.bf16.msra.mxu0 %v621
        %669 = vmatprep.subr.bf16.mxu0 0
        %670 = vmatpush1.bf16.msra.mxu0 %v622
        %671 = vmatprep.mubr.bf16.mxu0 %v480
        %672 = vmatmul.mubr.bf16.gmra.mrb[0].mxu0 %v479
        %v673 = vpop.f32.mrb[0].mxu0
        %v674 = vadd.f32 0.0, %v673
        %v675 = vpop.f32.mrb[0].mxu0
        %v676 = vpop.f32.mrb[0].mxu0
        %v677 = vadd.f32 0.0, %v676
        %v678 = vpop.f32.mrb[0].mxu0
        %679 = vmatprep.mubr.bf16.mxu0 %v482
        %680 = vmatmul.mubr.bf16.gmra.mrb[0].mxu0 %v481
        %v681 = vpop.f32.mrb[0].mxu0
        %v682 = vadd.f32 0.0, %v681
        %v683 = vpop.f32.mrb[0].mxu0
        %v684 = vpop.f32.mrb[0].mxu0
        %v685 = vadd.f32 0.0, %v684
        %v686 = vpop.f32.mrb[0].mxu0
        %687 = vmatprep.mubr.bf16.mxu0 %v484
        %688 = vmatmul.mubr.bf16.gmra.mrb[0].mxu0 %v483
        %v689 = vpop.f32.mrb[0].mxu0
        %v690 = vadd.f32 0.0, %v689
        %v691 = vpop.f32.mrb[0].mxu0
        %v692 = vpop.f32.mrb[0].mxu0
        %v693 = vadd.f32 0.0, %v692
        %v694 = vpop.f32.mrb[0].mxu0
        %695 = vmatprep.mubr.bf16.mxu0 %v486
        %696 = vmatmul.mubr.bf16.gmra.mrb[0].mxu0 %v485
        %v697 = vpop.f32.mrb[0].mxu0
        %v698 = vadd.f32 0.0, %v697
        %v699 = vpop.f32.mrb[0].mxu0
        %v700 = vpop.f32.mrb[0].mxu0
        %v701 = vadd.f32 0.0, %v700
        %v702 = vpop.f32.mrb[0].mxu0
        %703 = vmatprep.mubr.bf16.mxu0 %v488
        %704 = vmatmul.mubr.bf16.gmra.mrb[0].mxu0 %v487
        %v705 = vpop.f32.mrb[0].mxu0
        %v706 = vadd.f32 0.0, %v705
        %v707 = vpop.f32.mrb[0].mxu0
        %v708 = vpop.f32.mrb[0].mxu0
        %v709 = vadd.f32 0.0, %v708
        %v710 = vpop.f32.mrb[0].mxu0
        %711 = vmatprep.mubr.bf16.mxu0 %v490
        %712 = vmatmul.mubr.bf16.gmra.mrb[0].mxu0 %v489
        %v713 = vpop.f32.mrb[0].mxu0
        %v714 = vadd.f32 0.0, %v713
        %v715 = vpop.f32.mrb[0].mxu0
        %v716 = vpop.f32.mrb[0].mxu0
        %v717 = vadd.f32 0.0, %v716
        %v718 = vpop.f32.mrb[0].mxu0
        %719 = vmatprep.mubr.bf16.mxu0 %v492
        %720 = vmatmul.mubr.bf16.gmra.mrb[0].mxu0 %v491
        %v721 = vpop.f32.mrb[0].mxu0
        %v722 = vadd.f32 0.0, %v721
        %v723 = vpop.f32.mrb[0].mxu0
        %v724 = vpop.f32.mrb[0].mxu0
        %v725 = vadd.f32 0.0, %v724
        %v726 = vpop.f32.mrb[0].mxu0
        %727 = vmatprep.mubr.bf16.mxu0 %v494
        %728 = vmatmul.mubr.bf16.gmra.mrb[0].mxu0 %v493
        %v729 = vpop.f32.mrb[0].mxu0
        %v730 = vadd.f32 0.0, %v729
        %v731 = vpop.f32.mrb[0].mxu0
        %v732 = vpop.f32.mrb[0].mxu0
        %v733 = vadd.f32 0.0, %v732
        %v734 = vpop.f32.mrb[0].mxu0
        %735 = vmatprep.mubr.bf16.mxu0 %v496
        %736 = vmatmul.mubr.bf16.gmra.mrb[0].mxu0 %v495
        %v737 = vpop.f32.mrb[0].mxu0
        %v738 = vadd.f32 0.0, %v737
        %v739 = vpop.f32.mrb[0].mxu0
        %v740 = vpop.f32.mrb[0].mxu0
        %v741 = vadd.f32 0.0, %v740
        %v742 = vpop.f32.mrb[0].mxu0
        %743 = vmatprep.mubr.bf16.mxu0 %v498
        %744 = vmatmul.mubr.bf16.gmra.mrb[0].mxu0 %v497
        %v745 = vpop.f32.mrb[0].mxu0
        %v746 = vadd.f32 0.0, %v745
        %v747 = vpop.f32.mrb[0].mxu0
        %v748 = vpop.f32.mrb[0].mxu0
        %v749 = vadd.f32 0.0, %v748
        %v750 = vpop.f32.mrb[0].mxu0
        %751 = vmatprep.mubr.bf16.mxu0 %v500
        %752 = vmatmul.mubr.bf16.gmra.mrb[0].mxu0 %v499
        %v753 = vpop.f32.mrb[0].mxu0
        %v754 = vadd.f32 0.0, %v753
        %v755 = vpop.f32.mrb[0].mxu0
        %v756 = vpop.f32.mrb[0].mxu0
        %v757 = vadd.f32 0.0, %v756
        %v758 = vpop.f32.mrb[0].mxu0
        %759 = vmatprep.mubr.bf16.mxu0 %v502
        %760 = vmatmul.mubr.bf16.gmra.mrb[0].mxu0 %v501
        %v761 = vpop.f32.mrb[0].mxu0
        %v762 = vadd.f32 0.0, %v761
        %v763 = vpop.f32.mrb[0].mxu0
        %v764 = vpop.f32.mrb[0].mxu0
        %v765 = vadd.f32 0.0, %v764
        %v766 = vpop.f32.mrb[0].mxu0
        %767 = vmatprep.mubr.bf16.mxu0 %v504
        %768 = vmatmul.mubr.bf16.gmra.mrb[0].mxu0 %v503
        %v769 = vpop.f32.mrb[0].mxu0
        %v770 = vadd.f32 0.0, %v769
        %v771 = vpop.f32.mrb[0].mxu0
        %v772 = vpop.f32.mrb[0].mxu0
        %v773 = vadd.f32 0.0, %v772
        %v774 = vpop.f32.mrb[0].mxu0
        %775 = vmatprep.mubr.bf16.mxu0 %v506
        %776 = vmatmul.mubr.bf16.gmra.mrb[0].mxu0 %v505
        %v777 = vpop.f32.mrb[0].mxu0
        %v778 = vadd.f32 0.0, %v777
        %v779 = vpop.f32.mrb[0].mxu0
        %v780 = vpop.f32.mrb[0].mxu0
        %v781 = vadd.f32 0.0, %v780
        %v782 = vpop.f32.mrb[0].mxu0
        %783 = vmatprep.mubr.bf16.mxu0 %v508
        %784 = vmatmul.mubr.bf16.gmra.mrb[0].mxu0 %v507
        %v785 = vpop.f32.mrb[0].mxu0
        %v786 = vadd.f32 0.0, %v785
        %v787 = vpop.f32.mrb[0].mxu0
        %v788 = vpop.f32.mrb[0].mxu0
        %v789 = vadd.f32 0.0, %v788
        %v790 = vpop.f32.mrb[0].mxu0
        %791 = vmatprep.mubr.bf16.mxu0 %v510
        %792 = vmatmul.mubr.bf16.gmra.mrb[0].mxu0 %v509
        %v793 = vpop.f32.mrb[0].mxu0
        %v794 = vadd.f32 0.0, %v793
        %v795 = vpop.f32.mrb[0].mxu0
        %v796 = vpop.f32.mrb[0].mxu0
        %v797 = vadd.f32 0.0, %v796
        %v798 = vpop.f32.mrb[0].mxu0
        %799 = vdwg.mxu0
        %v800 = vpack.c.bf16 %v677, %v674
        %v801 = vpack.c.bf16 %v685, %v682
        %v802 = vpack.c.bf16 %v693, %v690
        %v803 = vpack.c.bf16 %v701, %v698
        %v804 = vpack.c.bf16 %v709, %v706
        %v805 = vpack.c.bf16 %v717, %v714
        %v806 = vpack.c.bf16 %v725, %v722
        %v807 = vpack.c.bf16 %v733, %v730
        %v808 = vpack.c.bf16 %v741, %v738
        %v809 = vpack.c.bf16 %v749, %v746
        %v810 = vpack.c.bf16 %v757, %v754
        %v811 = vpack.c.bf16 %v765, %v762
        %v812 = vpack.c.bf16 %v773, %v770
        %v813 = vpack.c.bf16 %v781, %v778
        %v814 = vpack.c.bf16 %v789, %v786
        %v815 = vpack.c.bf16 %v797, %v794
        %v816 = vld [vmem:[%s2] sm:$0xf]
        %v817 = vld [vmem:[%s2 + $0x4] sm:$0xf]
        %v820 = vunpack.c.l.b16 %v816
        %v821 = vunpack.c.l.b16 %v817
        %v822 = vpack.c.b16 %v821, %v820
        %vm824 = vcmask 130048
        %v826 = vsel %vm824, %v800, 0
        %v829 = vsel %vm824, %v801, 0
        %v832 = vsel %vm824, %v802, 0
        %v835 = vsel %vm824, %v803, 0
        %v838 = vsel %vm824, %v804, 0
        %v841 = vsel %vm824, %v805, 0
        %v844 = vsel %vm824, %v806, 0
        %v847 = vsel %vm824, %v807, 0
        %v850 = vsel %vm824, %v808, 0
        %v853 = vsel %vm824, %v809, 0
        %v856 = vsel %vm824, %v810, 0
        %v859 = vsel %vm824, %v811, 0
        %v862 = vsel %vm824, %v812, 0
        %v865 = vsel %vm824, %v813, 0
        %v868 = vsel %vm824, %v814, 0
        %v871 = vsel %vm824, %v815, 0
        %873 = vmatprep.subr.bf16.mxu0 0
        %874 = vmatpush1.bf16.msra.mxu0 %v822
        %875 = vmatprep.subr.bf16.mxu0 0
        %876 = vmatpush1.bf16.msra.mxu0 0
        %877 = vmatprep.subr.bf16.mxu0 0
        %878 = vmatpush1.bf16.msra.mxu0 0
        %879 = vmatprep.subr.bf16.mxu0 0
        %880 = vmatpush1.bf16.msra.mxu0 0
        %881 = vmatprep.subr.bf16.mxu0 0
        %882 = vmatpush1.bf16.msra.mxu0 0
        %883 = vmatprep.subr.bf16.mxu0 0
        %884 = vmatpush1.bf16.msra.mxu0 0
        %885 = vmatprep.subr.bf16.mxu0 0
        %886 = vmatpush1.bf16.msra.mxu0 0
        %887 = vmatprep.subr.bf16.mxu0 0
        %888 = vmatpush1.bf16.msra.mxu0 0
        %889 = vmatprep.subr.bf16.mxu0 0
        %890 = vmatpush1.bf16.msra.mxu0 0
        %891 = vmatprep.subr.bf16.mxu0 0
        %892 = vmatpush1.bf16.msra.mxu0 0
        %893 = vmatprep.subr.bf16.mxu0 0
        %894 = vmatpush1.bf16.msra.mxu0 0
        %895 = vmatprep.subr.bf16.mxu0 0
        %896 = vmatpush1.bf16.msra.mxu0 0
        %897 = vmatprep.subr.bf16.mxu0 0
        %898 = vmatpush1.bf16.msra.mxu0 0
        %899 = vmatprep.subr.bf16.mxu0 0
        %900 = vmatpush1.bf16.msra.mxu0 0
        %901 = vmatprep.subr.bf16.mxu0 0
        %902 = vmatpush1.bf16.msra.mxu0 0
        %903 = vmatprep.subr.bf16.mxu0 0
        %904 = vmatpush1.bf16.msra.mxu0 0
        %905 = vmatprep.mubr.bf16.mxu0 0
        %906 = vmatmul.mubr.bf16.gmra.mrb[0].mxu0 %v826
        %v907 = vpop.f32.mrb[0].mxu0
        %v908 = vadd.f32 0.0, %v907
        %v909 = vpop.f32.mrb[0].mxu0
        %v910 = vpop.f32.mrb[0].mxu0
        %v911 = vadd.f32 0.0, %v910
        %v912 = vpop.f32.mrb[0].mxu0
        %913 = vmatprep.mubr.bf16.mxu0 0
        %914 = vmatmul.mubr.bf16.gmra.mrb[0].mxu0 %v829
        %v915 = vpop.f32.mrb[0].mxu0
        %v916 = vadd.f32 0.0, %v915
        %v917 = vpop.f32.mrb[0].mxu0
        %v918 = vpop.f32.mrb[0].mxu0
        %v919 = vadd.f32 0.0, %v918
        %v920 = vpop.f32.mrb[0].mxu0
        %921 = vmatprep.mubr.bf16.mxu0 0
        %922 = vmatmul.mubr.bf16.gmra.mrb[0].mxu0 %v832
        %v923 = vpop.f32.mrb[0].mxu0
        %v924 = vadd.f32 0.0, %v923
        %v925 = vpop.f32.mrb[0].mxu0
        %v926 = vpop.f32.mrb[0].mxu0
        %v927 = vadd.f32 0.0, %v926
        %v928 = vpop.f32.mrb[0].mxu0
        %929 = vmatprep.mubr.bf16.mxu0 0
        %930 = vmatmul.mubr.bf16.gmra.mrb[0].mxu0 %v835
        %v931 = vpop.f32.mrb[0].mxu0
        %v932 = vadd.f32 0.0, %v931
        %v933 = vpop.f32.mrb[0].mxu0
        %v934 = vpop.f32.mrb[0].mxu0
        %v935 = vadd.f32 0.0, %v934
        %v936 = vpop.f32.mrb[0].mxu0
        %937 = vmatprep.mubr.bf16.mxu0 0
        %938 = vmatmul.mubr.bf16.gmra.mrb[0].mxu0 %v838
        %v939 = vpop.f32.mrb[0].mxu0
        %v940 = vadd.f32 0.0, %v939
        %v941 = vpop.f32.mrb[0].mxu0
        %v942 = vpop.f32.mrb[0].mxu0
        %v943 = vadd.f32 0.0, %v942
        %v944 = vpop.f32.mrb[0].mxu0
        %945 = vmatprep.mubr.bf16.mxu0 0
        %946 = vmatmul.mubr.bf16.gmra.mrb[0].mxu0 %v841
        %v947 = vpop.f32.mrb[0].mxu0
        %v948 = vadd.f32 0.0, %v947
        %v949 = vpop.f32.mrb[0].mxu0
        %v950 = vpop.f32.mrb[0].mxu0
        %v951 = vadd.f32 0.0, %v950
        %v952 = vpop.f32.mrb[0].mxu0
        %953 = vmatprep.mubr.bf16.mxu0 0
        %954 = vmatmul.mubr.bf16.gmra.mrb[0].mxu0 %v844
        %v955 = vpop.f32.mrb[0].mxu0
        %v956 = vadd.f32 0.0, %v955
        %v957 = vpop.f32.mrb[0].mxu0
        %v958 = vpop.f32.mrb[0].mxu0
        %v959 = vadd.f32 0.0, %v958
        %v960 = vpop.f32.mrb[0].mxu0
        %961 = vmatprep.mubr.bf16.mxu0 0
        %962 = vmatmul.mubr.bf16.gmra.mrb[0].mxu0 %v847
        %v963 = vpop.f32.mrb[0].mxu0
        %v964 = vadd.f32 0.0, %v963
        %v965 = vpop.f32.mrb[0].mxu0
        %v966 = vpop.f32.mrb[0].mxu0
        %v967 = vadd.f32 0.0, %v966
        %v968 = vpop.f32.mrb[0].mxu0
        %969 = vmatprep.mubr.bf16.mxu0 0
        %970 = vmatmul.mubr.bf16.gmra.mrb[0].mxu0 %v850
        %v971 = vpop.f32.mrb[0].mxu0
        %v972 = vadd.f32 0.0, %v971
        %v973 = vpop.f32.mrb[0].mxu0
        %v974 = vpop.f32.mrb[0].mxu0
        %v975 = vadd.f32 0.0, %v974
        %v976 = vpop.f32.mrb[0].mxu0
        %977 = vmatprep.mubr.bf16.mxu0 0
        %978 = vmatmul.mubr.bf16.gmra.mrb[0].mxu0 %v853
        %v979 = vpop.f32.mrb[0].mxu0
        %v980 = vadd.f32 0.0, %v979
        %v981 = vpop.f32.mrb[0].mxu0
        %v982 = vpop.f32.mrb[0].mxu0
        %v983 = vadd.f32 0.0, %v982
        %v984 = vpop.f32.mrb[0].mxu0
        %985 = vmatprep.mubr.bf16.mxu0 0
        %986 = vmatmul.mubr.bf16.gmra.mrb[0].mxu0 %v856
        %v987 = vpop.f32.mrb[0].mxu0
        %v988 = vadd.f32 0.0, %v987
        %v989 = vpop.f32.mrb[0].mxu0
        %v990 = vpop.f32.mrb[0].mxu0
        %v991 = vadd.f32 0.0, %v990
        %v992 = vpop.f32.mrb[0].mxu0
        %993 = vmatprep.mubr.bf16.mxu0 0
        %994 = vmatmul.mubr.bf16.gmra.mrb[0].mxu0 %v859
        %v995 = vpop.f32.mrb[0].mxu0
        %v996 = vadd.f32 0.0, %v995
        %v997 = vpop.f32.mrb[0].mxu0
        %v998 = vpop.f32.mrb[0].mxu0
        %v999 = vadd.f32 0.0, %v998
        %v1000 = vpop.f32.mrb[0].mxu0
        %1001 = vmatprep.mubr.bf16.mxu0 0
        %1002 = vmatmul.mubr.bf16.gmra.mrb[0].mxu0 %v862
        %v1003 = vpop.f32.mrb[0].mxu0
        %v1004 = vadd.f32 0.0, %v1003
        %v1005 = vpop.f32.mrb[0].mxu0
        %v1006 = vpop.f32.mrb[0].mxu0
        %v1007 = vadd.f32 0.0, %v1006
        %v1008 = vpop.f32.mrb[0].mxu0
        %1009 = vmatprep.mubr.bf16.mxu0 0
        %1010 = vmatmul.mubr.bf16.gmra.mrb[0].mxu0 %v865
        %v1011 = vpop.f32.mrb[0].mxu0
        %v1012 = vadd.f32 0.0, %v1011
        %v1013 = vpop.f32.mrb[0].mxu0
        %v1014 = vpop.f32.mrb[0].mxu0
        %v1015 = vadd.f32 0.0, %v1014
        %v1016 = vpop.f32.mrb[0].mxu0
        %1017 = vmatprep.mubr.bf16.mxu0 0
        %1018 = vmatmul.mubr.bf16.gmra.mrb[0].mxu0 %v868
        %v1019 = vpop.f32.mrb[0].mxu0
        %v1020 = vadd.f32 0.0, %v1019
        %v1021 = vpop.f32.mrb[0].mxu0
        %v1022 = vpop.f32.mrb[0].mxu0
        %v1023 = vadd.f32 0.0, %v1022
        %v1024 = vpop.f32.mrb[0].mxu0
        %1025 = vmatprep.mubr.bf16.mxu0 0
        %1026 = vmatmul.mubr.bf16.gmra.mrb[0].mxu0 %v871
        %v1027 = vpop.f32.mrb[0].mxu0
        %v1028 = vadd.f32 0.0, %v1027
        %v1029 = vpop.f32.mrb[0].mxu0
        %v1030 = vpop.f32.mrb[0].mxu0
        %v1031 = vadd.f32 0.0, %v1030
        %v1032 = vpop.f32.mrb[0].mxu0
        %1033 = vdwg.mxu0
        %v1034 = vsel %vm824, %v908, 0.0
        %v1035 = vsel %vm824, %v911, 0.0
        %v1036 = vadd.f32 %v1034, %v1035
        %v1037 = vsel %vm824, %v916, 0.0
        %v1038 = vadd.f32 %v1036, %v1037
        %v1039 = vsel %vm824, %v919, 0.0
        %v1040 = vadd.f32 %v1038, %v1039
        %v1041 = vrot.slane %v1040, 4
        %v1042 = vadd.f32 %v1040, %v1041
        %v1043 = vrot.slane %v1042, 2
        %v1044 = vadd.f32 %v1042, %v1043
        %v1045 = vrot.slane %v1044, 1
        %v1046 = vadd.f32 %v1044, %v1045
        %v1047 = vsel %vm824, %v924, 0.0
        %v1048 = vsel %vm824, %v927, 0.0
        %v1049 = vadd.f32 %v1047, %v1048
        %v1050 = vsel %vm824, %v932, 0.0
        %v1051 = vadd.f32 %v1049, %v1050
        %v1052 = vsel %vm824, %v935, 0.0
        %v1053 = vadd.f32 %v1051, %v1052
        %v1054 = vrot.slane %v1053, 4
        %v1055 = vadd.f32 %v1053, %v1054
        %v1056 = vrot.slane %v1055, 2
        %v1057 = vadd.f32 %v1055, %v1056
        %v1058 = vrot.slane %v1057, 1
        %v1059 = vadd.f32 %v1057, %v1058
        %v1060 = vsel %vm824, %v940, 0.0
        %v1061 = vsel %vm824, %v943, 0.0
        %v1062 = vadd.f32 %v1060, %v1061
        %v1063 = vsel %vm824, %v948, 0.0
        %v1064 = vadd.f32 %v1062, %v1063
        %v1065 = vsel %vm824, %v951, 0.0
        %v1066 = vadd.f32 %v1064, %v1065
        %v1067 = vrot.slane %v1066, 4
        %v1068 = vadd.f32 %v1066, %v1067
        %v1069 = vrot.slane %v1068, 2
        %v1070 = vadd.f32 %v1068, %v1069
        %v1071 = vrot.slane %v1070, 1
        %v1072 = vadd.f32 %v1070, %v1071
        %v1073 = vsel %vm824, %v956, 0.0
        %v1074 = vsel %vm824, %v959, 0.0
        %v1075 = vadd.f32 %v1073, %v1074
        %v1076 = vsel %vm824, %v964, 0.0
        %v1077 = vadd.f32 %v1075, %v1076
        %v1078 = vsel %vm824, %v967, 0.0
        %v1079 = vadd.f32 %v1077, %v1078
        %v1080 = vrot.slane %v1079, 4
        %v1081 = vadd.f32 %v1079, %v1080
        %v1082 = vrot.slane %v1081, 2
        %v1083 = vadd.f32 %v1081, %v1082
        %v1084 = vrot.slane %v1083, 1
        %v1085 = vadd.f32 %v1083, %v1084
        %v1086 = vsel %vm824, %v972, 0.0
        %v1087 = vsel %vm824, %v975, 0.0
        %v1088 = vadd.f32 %v1086, %v1087
        %v1089 = vsel %vm824, %v980, 0.0
        %v1090 = vadd.f32 %v1088, %v1089
        %v1091 = vsel %vm824, %v983, 0.0
        %v1092 = vadd.f32 %v1090, %v1091
        %v1093 = vrot.slane %v1092, 4
        %v1094 = vadd.f32 %v1092, %v1093
        %v1095 = vrot.slane %v1094, 2
        %v1096 = vadd.f32 %v1094, %v1095
        %v1097 = vrot.slane %v1096, 1
        %v1098 = vadd.f32 %v1096, %v1097
        %v1099 = vsel %vm824, %v988, 0.0
        %v1100 = vsel %vm824, %v991, 0.0
        %v1101 = vadd.f32 %v1099, %v1100
        %v1102 = vsel %vm824, %v996, 0.0
        %v1103 = vadd.f32 %v1101, %v1102
        %v1104 = vsel %vm824, %v999, 0.0
        %v1105 = vadd.f32 %v1103, %v1104
        %v1106 = vrot.slane %v1105, 4
        %v1107 = vadd.f32 %v1105, %v1106
        %v1108 = vrot.slane %v1107, 2
        %v1109 = vadd.f32 %v1107, %v1108
        %v1110 = vrot.slane %v1109, 1
        %v1111 = vadd.f32 %v1109, %v1110
        %v1112 = vsel %vm824, %v1004, 0.0
        %v1113 = vsel %vm824, %v1007, 0.0
        %v1114 = vadd.f32 %v1112, %v1113
        %v1115 = vsel %vm824, %v1012, 0.0
        %v1116 = vadd.f32 %v1114, %v1115
        %v1117 = vsel %vm824, %v1015, 0.0
        %v1118 = vadd.f32 %v1116, %v1117
        %v1119 = vrot.slane %v1118, 4
        %v1120 = vadd.f32 %v1118, %v1119
        %v1121 = vrot.slane %v1120, 2
        %v1122 = vadd.f32 %v1120, %v1121
        %v1123 = vrot.slane %v1122, 1
        %v1124 = vadd.f32 %v1122, %v1123
        %v1125 = vsel %vm824, %v1020, 0.0
        %v1126 = vsel %vm824, %v1023, 0.0
        %v1127 = vadd.f32 %v1125, %v1126
        %v1128 = vsel %vm824, %v1028, 0.0
        %v1129 = vadd.f32 %v1127, %v1128
        %v1130 = vsel %vm824, %v1031, 0.0
        %v1131 = vadd.f32 %v1129, %v1130
        %v1132 = vrot.slane %v1131, 4
        %v1133 = vadd.f32 %v1131, %v1132
        %v1134 = vrot.slane %v1133, 2
        %v1135 = vadd.f32 %v1133, %v1134
        %v1136 = vrot.slane %v1135, 1
        %v1137 = vadd.f32 %v1135, %v1136
        %v1138 = vrcp.pop 32.0
        %v1139 = vmul.f32 %v1046, %v1138
        %v1140 = vmul.f32 %v1059, %v1138
        %v1141 = vmul.f32 %v1072, %v1138
        %v1142 = vmul.f32 %v1085, %v1138
        %v1143 = vmul.f32 %v1098, %v1138
        %v1144 = vmul.f32 %v1111, %v1138
        %v1145 = vmul.f32 %v1124, %v1138
        %v1146 = vmul.f32 %v1137, %v1138
        %v1147 = vsub.f32 %v908, %v1139
        %v1148 = vsub.f32 %v911, %v1139
        %v1149 = vsub.f32 %v916, %v1139
        %v1150 = vsub.f32 %v919, %v1139
        %v1151 = vsub.f32 %v924, %v1140
        %v1152 = vsub.f32 %v927, %v1140
        %v1153 = vsub.f32 %v932, %v1140
        %v1154 = vsub.f32 %v935, %v1140
        %v1155 = vsub.f32 %v940, %v1141
        %v1156 = vsub.f32 %v943, %v1141
        %v1157 = vsub.f32 %v948, %v1141
        %v1158 = vsub.f32 %v951, %v1141
        %v1159 = vsub.f32 %v956, %v1142
        %v1160 = vsub.f32 %v959, %v1142
        %v1161 = vsub.f32 %v964, %v1142
        %v1162 = vsub.f32 %v967, %v1142
        %v1163 = vsub.f32 %v972, %v1143
        %v1164 = vsub.f32 %v975, %v1143
        %v1165 = vsub.f32 %v980, %v1143
        %v1166 = vsub.f32 %v983, %v1143
        %v1167 = vsub.f32 %v988, %v1144
        %v1168 = vsub.f32 %v991, %v1144
        %v1169 = vsub.f32 %v996, %v1144
        %v1170 = vsub.f32 %v999, %v1144
        %v1171 = vsub.f32 %v1004, %v1145
        %v1172 = vsub.f32 %v1007, %v1145
        %v1173 = vsub.f32 %v1012, %v1145
        %v1174 = vsub.f32 %v1015, %v1145
        %v1175 = vsub.f32 %v1020, %v1146
        %v1176 = vsub.f32 %v1023, %v1146
        %v1177 = vsub.f32 %v1028, %v1146
        %v1178 = vsub.f32 %v1031, %v1146
        %v1179 = vmul.f32 %v1147, %v1147
        %v1180 = vmul.f32 %v1148, %v1148
        %v1181 = vmul.f32 %v1149, %v1149
        %v1182 = vmul.f32 %v1150, %v1150
        %v1183 = vmul.f32 %v1151, %v1151
        %v1184 = vmul.f32 %v1152, %v1152
        %v1185 = vmul.f32 %v1153, %v1153
        %v1186 = vmul.f32 %v1154, %v1154
        %v1187 = vmul.f32 %v1155, %v1155
        %v1188 = vmul.f32 %v1156, %v1156
        %v1189 = vmul.f32 %v1157, %v1157
        %v1190 = vmul.f32 %v1158, %v1158
        %v1191 = vmul.f32 %v1159, %v1159
        %v1192 = vmul.f32 %v1160, %v1160
        %v1193 = vmul.f32 %v1161, %v1161
        %v1194 = vmul.f32 %v1162, %v1162
        %v1195 = vmul.f32 %v1163, %v1163
        %v1196 = vmul.f32 %v1164, %v1164
        %v1197 = vmul.f32 %v1165, %v1165
        %v1198 = vmul.f32 %v1166, %v1166
        %v1199 = vmul.f32 %v1167, %v1167
        %v1200 = vmul.f32 %v1168, %v1168
        %v1201 = vmul.f32 %v1169, %v1169
        %v1202 = vmul.f32 %v1170, %v1170
        %v1203 = vmul.f32 %v1171, %v1171
        %v1204 = vmul.f32 %v1172, %v1172
        %v1205 = vmul.f32 %v1173, %v1173
        %v1206 = vmul.f32 %v1174, %v1174
        %v1207 = vmul.f32 %v1175, %v1175
        %v1208 = vmul.f32 %v1176, %v1176
        %v1209 = vmul.f32 %v1177, %v1177
        %v1210 = vmul.f32 %v1178, %v1178
        %v1211 = vsel %vm824, %v1179, 0.0
        %v1212 = vsel %vm824, %v1180, 0.0
        %v1213 = vadd.f32 %v1211, %v1212
        %v1214 = vsel %vm824, %v1181, 0.0
        %v1215 = vadd.f32 %v1213, %v1214
        %v1216 = vsel %vm824, %v1182, 0.0
        %v1217 = vadd.f32 %v1215, %v1216
        %v1218 = vrot.slane %v1217, 4
        %v1219 = vadd.f32 %v1217, %v1218
        %v1220 = vrot.slane %v1219, 2
        %v1221 = vadd.f32 %v1219, %v1220
        %v1222 = vrot.slane %v1221, 1
        %v1223 = vadd.f32 %v1221, %v1222
        %v1224 = vsel %vm824, %v1183, 0.0
        %v1225 = vsel %vm824, %v1184, 0.0
        %v1226 = vadd.f32 %v1224, %v1225
        %v1227 = vsel %vm824, %v1185, 0.0
        %v1228 = vadd.f32 %v1226, %v1227
        %v1229 = vsel %vm824, %v1186, 0.0
        %v1230 = vadd.f32 %v1228, %v1229
        %v1231 = vrot.slane %v1230, 4
        %v1232 = vadd.f32 %v1230, %v1231
        %v1233 = vrot.slane %v1232, 2
        %v1234 = vadd.f32 %v1232, %v1233
        %v1235 = vrot.slane %v1234, 1
        %v1236 = vadd.f32 %v1234, %v1235
        %v1237 = vsel %vm824, %v1187, 0.0
        %v1238 = vsel %vm824, %v1188, 0.0
        %v1239 = vadd.f32 %v1237, %v1238
        %v1240 = vsel %vm824, %v1189, 0.0
        %v1241 = vadd.f32 %v1239, %v1240
        %v1242 = vsel %vm824, %v1190, 0.0
        %v1243 = vadd.f32 %v1241, %v1242
        %v1244 = vrot.slane %v1243, 4
        %v1245 = vadd.f32 %v1243, %v1244
        %v1246 = vrot.slane %v1245, 2
        %v1247 = vadd.f32 %v1245, %v1246
        %v1248 = vrot.slane %v1247, 1
        %v1249 = vadd.f32 %v1247, %v1248
        %v1250 = vsel %vm824, %v1191, 0.0
        %v1251 = vsel %vm824, %v1192, 0.0
        %v1252 = vadd.f32 %v1250, %v1251
        %v1253 = vsel %vm824, %v1193, 0.0
        %v1254 = vadd.f32 %v1252, %v1253
        %v1255 = vsel %vm824, %v1194, 0.0
        %v1256 = vadd.f32 %v1254, %v1255
        %v1257 = vrot.slane %v1256, 4
        %v1258 = vadd.f32 %v1256, %v1257
        %v1259 = vrot.slane %v1258, 2
        %v1260 = vadd.f32 %v1258, %v1259
        %v1261 = vrot.slane %v1260, 1
        %v1262 = vadd.f32 %v1260, %v1261
        %v1263 = vsel %vm824, %v1195, 0.0
        %v1264 = vsel %vm824, %v1196, 0.0
        %v1265 = vadd.f32 %v1263, %v1264
        %v1266 = vsel %vm824, %v1197, 0.0
        %v1267 = vadd.f32 %v1265, %v1266
        %v1268 = vsel %vm824, %v1198, 0.0
        %v1269 = vadd.f32 %v1267, %v1268
        %v1270 = vrot.slane %v1269, 4
        %v1271 = vadd.f32 %v1269, %v1270
        %v1272 = vrot.slane %v1271, 2
        %v1273 = vadd.f32 %v1271, %v1272
        %v1274 = vrot.slane %v1273, 1
        %v1275 = vadd.f32 %v1273, %v1274
        %v1276 = vsel %vm824, %v1199, 0.0
        %v1277 = vsel %vm824, %v1200, 0.0
        %v1278 = vadd.f32 %v1276, %v1277
        %v1279 = vsel %vm824, %v1201, 0.0
        %v1280 = vadd.f32 %v1278, %v1279
        %v1281 = vsel %vm824, %v1202, 0.0
        %v1282 = vadd.f32 %v1280, %v1281
        %v1283 = vrot.slane %v1282, 4
        %v1284 = vadd.f32 %v1282, %v1283
        %v1285 = vrot.slane %v1284, 2
        %v1286 = vadd.f32 %v1284, %v1285
        %v1287 = vrot.slane %v1286, 1
        %v1288 = vadd.f32 %v1286, %v1287
        %v1289 = vsel %vm824, %v1203, 0.0
        %v1290 = vsel %vm824, %v1204, 0.0
        %v1291 = vadd.f32 %v1289, %v1290
        %v1292 = vsel %vm824, %v1205, 0.0
        %v1293 = vadd.f32 %v1291, %v1292
        %v1294 = vsel %vm824, %v1206, 0.0
        %v1295 = vadd.f32 %v1293, %v1294
        %v1296 = vrot.slane %v1295, 4
        %v1297 = vadd.f32 %v1295, %v1296
        %v1298 = vrot.slane %v1297, 2
        %v1299 = vadd.f32 %v1297, %v1298
        %v1300 = vrot.slane %v1299, 1
        %v1301 = vadd.f32 %v1299, %v1300
        %v1302 = vsel %vm824, %v1207, 0.0
        %v1303 = vsel %vm824, %v1208, 0.0
        %v1304 = vadd.f32 %v1302, %v1303
        %v1305 = vsel %vm824, %v1209, 0.0
        %v1306 = vadd.f32 %v1304, %v1305
        %v1307 = vsel %vm824, %v1210, 0.0
        %v1308 = vadd.f32 %v1306, %v1307
        %v1309 = vrot.slane %v1308, 4
        %v1310 = vadd.f32 %v1308, %v1309
        %v1311 = vrot.slane %v1310, 2
        %v1312 = vadd.f32 %v1310, %v1311
        %v1313 = vrot.slane %v1312, 1
        %v1314 = vadd.f32 %v1312, %v1313
        %v1315 = vmul.f32 %v1223, %v1138
        %v1316 = vmul.f32 %v1236, %v1138
        %v1317 = vmul.f32 %v1249, %v1138
        %v1318 = vmul.f32 %v1262, %v1138
        %v1319 = vmul.f32 %v1275, %v1138
        %v1320 = vmul.f32 %v1288, %v1138
        %v1321 = vmul.f32 %v1301, %v1138
        %v1322 = vmul.f32 %v1314, %v1138
        %v1323 = vadd.f32 %v1315, 1e-05
        %v1324 = vadd.f32 %v1316, 1e-05
        %v1325 = vadd.f32 %v1317, 1e-05
        %v1326 = vadd.f32 %v1318, 1e-05
        %v1327 = vadd.f32 %v1319, 1e-05
        %v1328 = vadd.f32 %v1320, 1e-05
        %v1329 = vadd.f32 %v1321, 1e-05
        %v1330 = vadd.f32 %v1322, 1e-05
        %v1331 = vrsqrt.pop %v1323
        %v1332 = vrsqrt.pop %v1324
        %v1333 = vrsqrt.pop %v1325
        %v1334 = vrsqrt.pop %v1326
        %v1335 = vrsqrt.pop %v1327
        %v1336 = vrsqrt.pop %v1328
        %v1337 = vrsqrt.pop %v1329
        %v1338 = vrsqrt.pop %v1330
        %v1339 = vmul.f32 %v1147, %v1331
        %v1340 = vmul.f32 %v1148, %v1331
        %v1341 = vmul.f32 %v1149, %v1331
        %v1342 = vmul.f32 %v1150, %v1331
        %v1343 = vmul.f32 %v1151, %v1332
        %v1344 = vmul.f32 %v1152, %v1332
        %v1345 = vmul.f32 %v1153, %v1332
        %v1346 = vmul.f32 %v1154, %v1332
        %v1347 = vmul.f32 %v1155, %v1333
        %v1348 = vmul.f32 %v1156, %v1333
        %v1349 = vmul.f32 %v1157, %v1333
        %v1350 = vmul.f32 %v1158, %v1333
        %v1351 = vmul.f32 %v1159, %v1334
        %v1352 = vmul.f32 %v1160, %v1334
        %v1353 = vmul.f32 %v1161, %v1334
        %v1354 = vmul.f32 %v1162, %v1334
        %v1355 = vmul.f32 %v1163, %v1335
        %v1356 = vmul.f32 %v1164, %v1335
        %v1357 = vmul.f32 %v1165, %v1335
        %v1358 = vmul.f32 %v1166, %v1335
        %v1359 = vmul.f32 %v1167, %v1336
        %v1360 = vmul.f32 %v1168, %v1336
        %v1361 = vmul.f32 %v1169, %v1336
        %v1362 = vmul.f32 %v1170, %v1336
        %v1363 = vmul.f32 %v1171, %v1337
        %v1364 = vmul.f32 %v1172, %v1337
        %v1365 = vmul.f32 %v1173, %v1337
        %v1366 = vmul.f32 %v1174, %v1337
        %v1367 = vmul.f32 %v1175, %v1338
        %v1368 = vmul.f32 %v1176, %v1338
        %v1369 = vmul.f32 %v1177, %v1338
        %v1370 = vmul.f32 %v1178, %v1338
        %v1371 = vlaneseq
        %v1372 = vshrl.u32 %v1371, 7
        %v1373 = vsub.s32 0, %v1372
        %v1374 = vrot.slane %v350, %v1373
        %v1375 = vmul.f32 %v1339, %v1374
        %v1376 = vmul.f32 %v1340, %v1374
        %v1377 = vmul.f32 %v1341, %v1374
        %v1378 = vmul.f32 %v1342, %v1374
        %v1379 = vmul.f32 %v1343, %v1374
        %v1380 = vmul.f32 %v1344, %v1374
        %v1381 = vmul.f32 %v1345, %v1374
        %v1382 = vmul.f32 %v1346, %v1374
        %v1383 = vmul.f32 %v1347, %v1374
        %v1384 = vmul.f32 %v1348, %v1374
        %v1385 = vmul.f32 %v1349, %v1374
        %v1386 = vmul.f32 %v1350, %v1374
        %v1387 = vmul.f32 %v1351, %v1374
        %v1388 = vmul.f32 %v1352, %v1374
        %v1389 = vmul.f32 %v1353, %v1374
        %v1390 = vmul.f32 %v1354, %v1374
        %v1391 = vmul.f32 %v1355, %v1374
        %v1392 = vmul.f32 %v1356, %v1374
        %v1393 = vmul.f32 %v1357, %v1374
        %v1394 = vmul.f32 %v1358, %v1374
        %v1395 = vmul.f32 %v1359, %v1374
        %v1396 = vmul.f32 %v1360, %v1374
        %v1397 = vmul.f32 %v1361, %v1374
        %v1398 = vmul.f32 %v1362, %v1374
        %v1399 = vmul.f32 %v1363, %v1374
        %v1400 = vmul.f32 %v1364, %v1374
        %v1401 = vmul.f32 %v1365, %v1374
        %v1402 = vmul.f32 %v1366, %v1374
        %v1403 = vmul.f32 %v1367, %v1374
        %v1404 = vmul.f32 %v1368, %v1374
        %v1405 = vmul.f32 %v1369, %v1374
        %v1406 = vmul.f32 %v1370, %v1374
        %v1407 = vlaneseq
        %v1408 = vshrl.u32 %v1407, 7
        %v1409 = vsub.s32 1, %v1408
        %v1410 = vrot.slane %v350, %v1409
        %v1411 = vadd.f32 %v1375, %v1410
        %v1412 = vadd.f32 %v1376, %v1410
        %v1413 = vadd.f32 %v1377, %v1410
        %v1414 = vadd.f32 %v1378, %v1410
        %v1415 = vadd.f32 %v1379, %v1410
        %v1416 = vadd.f32 %v1380, %v1410
        %v1417 = vadd.f32 %v1381, %v1410
        %v1418 = vadd.f32 %v1382, %v1410
        %v1419 = vadd.f32 %v1383, %v1410
        %v1420 = vadd.f32 %v1384, %v1410
        %v1421 = vadd.f32 %v1385, %v1410
        %v1422 = vadd.f32 %v1386, %v1410
        %v1423 = vadd.f32 %v1387, %v1410
        %v1424 = vadd.f32 %v1388, %v1410
        %v1425 = vadd.f32 %v1389, %v1410
        %v1426 = vadd.f32 %v1390, %v1410
        %v1427 = vadd.f32 %v1391, %v1410
        %v1428 = vadd.f32 %v1392, %v1410
        %v1429 = vadd.f32 %v1393, %v1410
        %v1430 = vadd.f32 %v1394, %v1410
        %v1431 = vadd.f32 %v1395, %v1410
        %v1432 = vadd.f32 %v1396, %v1410
        %v1433 = vadd.f32 %v1397, %v1410
        %v1434 = vadd.f32 %v1398, %v1410
        %v1435 = vadd.f32 %v1399, %v1410
        %v1436 = vadd.f32 %v1400, %v1410
        %v1437 = vadd.f32 %v1401, %v1410
        %v1438 = vadd.f32 %v1402, %v1410
        %v1439 = vadd.f32 %v1403, %v1410
        %v1440 = vadd.f32 %v1404, %v1410
        %v1441 = vadd.f32 %v1405, %v1410
        %v1442 = vadd.f32 %v1406, %v1410
        %v1443 = vmax.f32 %v1411, 0.0
        %v1444 = vmax.f32 %v1412, 0.0
        %v1445 = vmax.f32 %v1413, 0.0
        %v1446 = vmax.f32 %v1414, 0.0
        %v1447 = vmax.f32 %v1415, 0.0
        %v1448 = vmax.f32 %v1416, 0.0
        %v1449 = vmax.f32 %v1417, 0.0
        %v1450 = vmax.f32 %v1418, 0.0
        %v1451 = vmax.f32 %v1419, 0.0
        %v1452 = vmax.f32 %v1420, 0.0
        %v1453 = vmax.f32 %v1421, 0.0
        %v1454 = vmax.f32 %v1422, 0.0
        %v1455 = vmax.f32 %v1423, 0.0
        %v1456 = vmax.f32 %v1424, 0.0
        %v1457 = vmax.f32 %v1425, 0.0
        %v1458 = vmax.f32 %v1426, 0.0
        %v1459 = vmax.f32 %v1427, 0.0
        %v1460 = vmax.f32 %v1428, 0.0
        %v1461 = vmax.f32 %v1429, 0.0
        %v1462 = vmax.f32 %v1430, 0.0
        %v1463 = vmax.f32 %v1431, 0.0
        %v1464 = vmax.f32 %v1432, 0.0
        %v1465 = vmax.f32 %v1433, 0.0
        %v1466 = vmax.f32 %v1434, 0.0
        %v1467 = vmax.f32 %v1435, 0.0
        %v1468 = vmax.f32 %v1436, 0.0
        %v1469 = vmax.f32 %v1437, 0.0
        %v1470 = vmax.f32 %v1438, 0.0
        %v1471 = vmax.f32 %v1439, 0.0
        %v1472 = vmax.f32 %v1440, 0.0
        %v1473 = vmax.f32 %v1441, 0.0
        %v1474 = vmax.f32 %v1442, 0.0
        %v1475 = vpack.c.bf16 %v1444, %v1443
        %v1476 = vpack.c.bf16 %v1446, %v1445
        %v1477 = vpack.c.bf16 %v1448, %v1447
        %v1478 = vpack.c.bf16 %v1450, %v1449
        %v1479 = vpack.c.bf16 %v1452, %v1451
        %v1480 = vpack.c.bf16 %v1454, %v1453
        %v1481 = vpack.c.bf16 %v1456, %v1455
        %v1482 = vpack.c.bf16 %v1458, %v1457
        %v1483 = vpack.c.bf16 %v1460, %v1459
        %v1484 = vpack.c.bf16 %v1462, %v1461
        %v1485 = vpack.c.bf16 %v1464, %v1463
        %v1486 = vpack.c.bf16 %v1466, %v1465
        %v1487 = vpack.c.bf16 %v1468, %v1467
        %v1488 = vpack.c.bf16 %v1470, %v1469
        %v1489 = vpack.c.bf16 %v1472, %v1471
        %v1490 = vpack.c.bf16 %v1474, %v1473
        %v1491 = vld [vmem:[%s3] sm:$0xf]
        %v1492 = vld [vmem:[%s3 + $0x4] sm:$0xf]
        %v1493 = vlaneseq
        %v1494 = vshrl.u32 %v1493, 7
        %v1495 = vsub.s32 2, %v1494
        %v1496 = vrot.slane %v350, %v1495
        %v1499 = vunpack.c.l.b16 %v1491
        %v1500 = vunpack.c.l.b16 %v1492
        %v1501 = vpack.c.b16 %v1500, %v1499
        %v1504 = vsel %vm824, %v1475, 0
        %v1507 = vsel %vm824, %v1476, 0
        %v1510 = vsel %vm824, %v1477, 0
        %v1513 = vsel %vm824, %v1478, 0
        %v1516 = vsel %vm824, %v1479, 0
        %v1519 = vsel %vm824, %v1480, 0
        %v1522 = vsel %vm824, %v1481, 0
        %v1525 = vsel %vm824, %v1482, 0
        %v1528 = vsel %vm824, %v1483, 0
        %v1531 = vsel %vm824, %v1484, 0
        %v1534 = vsel %vm824, %v1485, 0
        %v1537 = vsel %vm824, %v1486, 0
        %v1540 = vsel %vm824, %v1487, 0
        %v1543 = vsel %vm824, %v1488, 0
        %v1546 = vsel %vm824, %v1489, 0
        %v1549 = vsel %vm824, %v1490, 0
        %1551 = vmatprep.subr.bf16.mxu0 0
        %1552 = vmatpush1.bf16.msra.mxu0 %v1501
        %1553 = vmatprep.subr.bf16.mxu0 0
        %1554 = vmatpush1.bf16.msra.mxu0 0
        %1555 = vmatprep.subr.bf16.mxu0 0
        %1556 = vmatpush1.bf16.msra.mxu0 0
        %1557 = vmatprep.subr.bf16.mxu0 0
        %1558 = vmatpush1.bf16.msra.mxu0 0
        %1559 = vmatprep.subr.bf16.mxu0 0
        %1560 = vmatpush1.bf16.msra.mxu0 0
        %1561 = vmatprep.subr.bf16.mxu0 0
        %1562 = vmatpush1.bf16.msra.mxu0 0
        %1563 = vmatprep.subr.bf16.mxu0 0
        %1564 = vmatpush1.bf16.msra.mxu0 0
        %1565 = vmatprep.subr.bf16.mxu0 0
        %1566 = vmatpush1.bf16.msra.mxu0 0
        %1567 = vmatprep.subr.bf16.mxu0 0
        %1568 = vmatpush1.bf16.msra.mxu0 0
        %1569 = vmatprep.subr.bf16.mxu0 0
        %1570 = vmatpush1.bf16.msra.mxu0 0
        %1571 = vmatprep.subr.bf16.mxu0 0
        %1572 = vmatpush1.bf16.msra.mxu0 0
        %1573 = vmatprep.subr.bf16.mxu0 0
        %1574 = vmatpush1.bf16.msra.mxu0 0
        %1575 = vmatprep.subr.bf16.mxu0 0
        %1576 = vmatpush1.bf16.msra.mxu0 0
        %1577 = vmatprep.subr.bf16.mxu0 0
        %1578 = vmatpush1.bf16.msra.mxu0 0
        %1579 = vmatprep.subr.bf16.mxu0 0
        %1580 = vmatpush1.bf16.msra.mxu0 0
        %1581 = vmatprep.subr.bf16.mxu0 0
        %1582 = vmatpush1.bf16.msra.mxu0 0
        %1583 = vmatprep.mubr.bf16.mxu0 0
        %1584 = vmatmul.mubr.bf16.gmra.mrb[0].mxu0 %v1504
        %v1585 = vpop.f32.mrb[0].mxu0
        %v1586 = vadd.f32 %v1496, %v1585
        %v1587 = vpop.f32.mrb[0].mxu0
        %v1588 = vpop.f32.mrb[0].mxu0
        %v1589 = vadd.f32 %v1496, %v1588
        %v1590 = vpop.f32.mrb[0].mxu0
        %1591 = vmatprep.mubr.bf16.mxu0 0
        %1592 = vmatmul.mubr.bf16.gmra.mrb[0].mxu0 %v1507
        %v1593 = vpop.f32.mrb[0].mxu0
        %v1594 = vadd.f32 %v1496, %v1593
        %v1595 = vpop.f32.mrb[0].mxu0
        %v1596 = vpop.f32.mrb[0].mxu0
        %v1597 = vadd.f32 %v1496, %v1596
        %v1598 = vpop.f32.mrb[0].mxu0
        %1599 = vmatprep.mubr.bf16.mxu0 0
        %1600 = vmatmul.mubr.bf16.gmra.mrb[0].mxu0 %v1510
        %v1601 = vpop.f32.mrb[0].mxu0
        %v1602 = vadd.f32 %v1496, %v1601
        %v1603 = vpop.f32.mrb[0].mxu0
        %v1604 = vpop.f32.mrb[0].mxu0
        %v1605 = vadd.f32 %v1496, %v1604
        %v1606 = vpop.f32.mrb[0].mxu0
        %1607 = vmatprep.mubr.bf16.mxu0 0
        %1608 = vmatmul.mubr.bf16.gmra.mrb[0].mxu0 %v1513
        %v1609 = vpop.f32.mrb[0].mxu0
        %v1610 = vadd.f32 %v1496, %v1609
        %v1611 = vpop.f32.mrb[0].mxu0
        %v1612 = vpop.f32.mrb[0].mxu0
        %v1613 = vadd.f32 %v1496, %v1612
        %v1614 = vpop.f32.mrb[0].mxu0
        %1615 = vmatprep.mubr.bf16.mxu0 0
        %1616 = vmatmul.mubr.bf16.gmra.mrb[0].mxu0 %v1516
        %v1617 = vpop.f32.mrb[0].mxu0
        %v1618 = vadd.f32 %v1496, %v1617
        %v1619 = vpop.f32.mrb[0].mxu0
        %v1620 = vpop.f32.mrb[0].mxu0
        %v1621 = vadd.f32 %v1496, %v1620
        %v1622 = vpop.f32.mrb[0].mxu0
        %1623 = vmatprep.mubr.bf16.mxu0 0
        %1624 = vmatmul.mubr.bf16.gmra.mrb[0].mxu0 %v1519
        %v1625 = vpop.f32.mrb[0].mxu0
        %v1626 = vadd.f32 %v1496, %v1625
        %v1627 = vpop.f32.mrb[0].mxu0
        %v1628 = vpop.f32.mrb[0].mxu0
        %v1629 = vadd.f32 %v1496, %v1628
        %v1630 = vpop.f32.mrb[0].mxu0
        %1631 = vmatprep.mubr.bf16.mxu0 0
        %1632 = vmatmul.mubr.bf16.gmra.mrb[0].mxu0 %v1522
        %v1633 = vpop.f32.mrb[0].mxu0
        %v1634 = vadd.f32 %v1496, %v1633
        %v1635 = vpop.f32.mrb[0].mxu0
        %v1636 = vpop.f32.mrb[0].mxu0
        %v1637 = vadd.f32 %v1496, %v1636
        %v1638 = vpop.f32.mrb[0].mxu0
        %1639 = vmatprep.mubr.bf16.mxu0 0
        %1640 = vmatmul.mubr.bf16.gmra.mrb[0].mxu0 %v1525
        %v1641 = vpop.f32.mrb[0].mxu0
        %v1642 = vadd.f32 %v1496, %v1641
        %v1643 = vpop.f32.mrb[0].mxu0
        %v1644 = vpop.f32.mrb[0].mxu0
        %v1645 = vadd.f32 %v1496, %v1644
        %v1646 = vpop.f32.mrb[0].mxu0
        %1647 = vmatprep.mubr.bf16.mxu0 0
        %1648 = vmatmul.mubr.bf16.gmra.mrb[0].mxu0 %v1528
        %v1649 = vpop.f32.mrb[0].mxu0
        %v1650 = vadd.f32 %v1496, %v1649
        %v1651 = vpop.f32.mrb[0].mxu0
        %v1652 = vpop.f32.mrb[0].mxu0
        %v1653 = vadd.f32 %v1496, %v1652
        %v1654 = vpop.f32.mrb[0].mxu0
        %1655 = vmatprep.mubr.bf16.mxu0 0
        %1656 = vmatmul.mubr.bf16.gmra.mrb[0].mxu0 %v1531
        %v1657 = vpop.f32.mrb[0].mxu0
        %v1658 = vadd.f32 %v1496, %v1657
        %v1659 = vpop.f32.mrb[0].mxu0
        %v1660 = vpop.f32.mrb[0].mxu0
        %v1661 = vadd.f32 %v1496, %v1660
        %v1662 = vpop.f32.mrb[0].mxu0
        %1663 = vmatprep.mubr.bf16.mxu0 0
        %1664 = vmatmul.mubr.bf16.gmra.mrb[0].mxu0 %v1534
        %v1665 = vpop.f32.mrb[0].mxu0
        %v1666 = vadd.f32 %v1496, %v1665
        %v1667 = vpop.f32.mrb[0].mxu0
        %v1668 = vpop.f32.mrb[0].mxu0
        %v1669 = vadd.f32 %v1496, %v1668
        %v1670 = vpop.f32.mrb[0].mxu0
        %1671 = vmatprep.mubr.bf16.mxu0 0
        %1672 = vmatmul.mubr.bf16.gmra.mrb[0].mxu0 %v1537
        %v1673 = vpop.f32.mrb[0].mxu0
        %v1674 = vadd.f32 %v1496, %v1673
        %v1675 = vpop.f32.mrb[0].mxu0
        %v1676 = vpop.f32.mrb[0].mxu0
        %v1677 = vadd.f32 %v1496, %v1676
        %v1678 = vpop.f32.mrb[0].mxu0
        %1679 = vmatprep.mubr.bf16.mxu0 0
        %1680 = vmatmul.mubr.bf16.gmra.mrb[0].mxu0 %v1540
        %v1681 = vpop.f32.mrb[0].mxu0
        %v1682 = vadd.f32 %v1496, %v1681
        %v1683 = vpop.f32.mrb[0].mxu0
        %v1684 = vpop.f32.mrb[0].mxu0
        %v1685 = vadd.f32 %v1496, %v1684
        %v1686 = vpop.f32.mrb[0].mxu0
        %1687 = vmatprep.mubr.bf16.mxu0 0
        %1688 = vmatmul.mubr.bf16.gmra.mrb[0].mxu0 %v1543
        %v1689 = vpop.f32.mrb[0].mxu0
        %v1690 = vadd.f32 %v1496, %v1689
        %v1691 = vpop.f32.mrb[0].mxu0
        %v1692 = vpop.f32.mrb[0].mxu0
        %v1693 = vadd.f32 %v1496, %v1692
        %v1694 = vpop.f32.mrb[0].mxu0
        %1695 = vmatprep.mubr.bf16.mxu0 0
        %1696 = vmatmul.mubr.bf16.gmra.mrb[0].mxu0 %v1546
        %v1697 = vpop.f32.mrb[0].mxu0
        %v1698 = vadd.f32 %v1496, %v1697
        %v1699 = vpop.f32.mrb[0].mxu0
        %v1700 = vpop.f32.mrb[0].mxu0
        %v1701 = vadd.f32 %v1496, %v1700
        %v1702 = vpop.f32.mrb[0].mxu0
        %1703 = vmatprep.mubr.bf16.mxu0 0
        %1704 = vmatmul.mubr.bf16.gmra.mrb[0].mxu0 %v1549
        %v1705 = vpop.f32.mrb[0].mxu0
        %v1706 = vadd.f32 %v1496, %v1705
        %v1707 = vpop.f32.mrb[0].mxu0
        %v1708 = vpop.f32.mrb[0].mxu0
        %v1709 = vadd.f32 %v1496, %v1708
        %v1710 = vpop.f32.mrb[0].mxu0
        %1711 = vdwg.mxu0
        %v1712 = vmax.f32 %v1586, 0.0
        %v1713 = vmax.f32 %v1589, 0.0
        %v1714 = vmax.f32 %v1594, 0.0
        %v1715 = vmax.f32 %v1597, 0.0
        %v1716 = vmax.f32 %v1602, 0.0
        %v1717 = vmax.f32 %v1605, 0.0
        %v1718 = vmax.f32 %v1610, 0.0
        %v1719 = vmax.f32 %v1613, 0.0
        %v1720 = vmax.f32 %v1618, 0.0
        %v1721 = vmax.f32 %v1621, 0.0
        %v1722 = vmax.f32 %v1626, 0.0
        %v1723 = vmax.f32 %v1629, 0.0
        %v1724 = vmax.f32 %v1634, 0.0
        %v1725 = vmax.f32 %v1637, 0.0
        %v1726 = vmax.f32 %v1642, 0.0
        %v1727 = vmax.f32 %v1645, 0.0
        %v1728 = vmax.f32 %v1650, 0.0
        %v1729 = vmax.f32 %v1653, 0.0
        %v1730 = vmax.f32 %v1658, 0.0
        %v1731 = vmax.f32 %v1661, 0.0
        %v1732 = vmax.f32 %v1666, 0.0
        %v1733 = vmax.f32 %v1669, 0.0
        %v1734 = vmax.f32 %v1674, 0.0
        %v1735 = vmax.f32 %v1677, 0.0
        %v1736 = vmax.f32 %v1682, 0.0
        %v1737 = vmax.f32 %v1685, 0.0
        %v1738 = vmax.f32 %v1690, 0.0
        %v1739 = vmax.f32 %v1693, 0.0
        %v1740 = vmax.f32 %v1698, 0.0
        %v1741 = vmax.f32 %v1701, 0.0
        %v1742 = vmax.f32 %v1706, 0.0
        %v1743 = vmax.f32 %v1709, 0.0
        %v1744 = vpack.c.bf16 %v1713, %v1712
        %v1745 = vpack.c.bf16 %v1715, %v1714
        %v1746 = vpack.c.bf16 %v1717, %v1716
        %v1747 = vpack.c.bf16 %v1719, %v1718
        %v1748 = vpack.c.bf16 %v1721, %v1720
        %v1749 = vpack.c.bf16 %v1723, %v1722
        %v1750 = vpack.c.bf16 %v1725, %v1724
        %v1751 = vpack.c.bf16 %v1727, %v1726
        %v1752 = vpack.c.bf16 %v1729, %v1728
        %v1753 = vpack.c.bf16 %v1731, %v1730
        %v1754 = vpack.c.bf16 %v1733, %v1732
        %v1755 = vpack.c.bf16 %v1735, %v1734
        %v1756 = vpack.c.bf16 %v1737, %v1736
        %v1757 = vpack.c.bf16 %v1739, %v1738
        %v1758 = vpack.c.bf16 %v1741, %v1740
        %v1759 = vpack.c.bf16 %v1743, %v1742
        %1760 = vmatprep.subr.bf16.mxu0 0
        %1761 = vmatpush1.bf16.msra.mxu0 %v1744
        %1762 = vmatprep.subr.bf16.mxu0 0
        %1763 = vmatpush1.bf16.msra.mxu0 %v1745
        %1764 = vmatprep.subr.bf16.mxu0 0
        %1765 = vmatpush1.bf16.msra.mxu0 %v1746
        %1766 = vmatprep.subr.bf16.mxu0 0
        %1767 = vmatpush1.bf16.msra.mxu0 %v1747
        %1768 = vmatprep.subr.bf16.mxu0 0
        %1769 = vmatpush1.bf16.msra.mxu0 %v1748
        %1770 = vmatprep.subr.bf16.mxu0 0
        %1771 = vmatpush1.bf16.msra.mxu0 %v1749
        %1772 = vmatprep.subr.bf16.mxu0 0
        %1773 = vmatpush1.bf16.msra.mxu0 %v1750
        %1774 = vmatprep.subr.bf16.mxu0 0
        %1775 = vmatpush1.bf16.msra.mxu0 %v1751
        %1776 = vmatprep.subr.bf16.mxu0 0
        %1777 = vmatpush1.bf16.msra.mxu0 %v1752
        %1778 = vmatprep.subr.bf16.mxu0 0
        %1779 = vmatpush1.bf16.msra.mxu0 %v1753
        %1780 = vmatprep.subr.bf16.mxu0 0
        %1781 = vmatpush1.bf16.msra.mxu0 %v1754
        %1782 = vmatprep.subr.bf16.mxu0 0
        %1783 = vmatpush1.bf16.msra.mxu0 %v1755
        %1784 = vmatprep.subr.bf16.mxu0 0
        %1785 = vmatpush1.bf16.msra.mxu0 %v1756
        %1786 = vmatprep.subr.bf16.mxu0 0
        %1787 = vmatpush1.bf16.msra.mxu0 %v1757
        %1788 = vmatprep.subr.bf16.mxu0 0
        %1789 = vmatpush1.bf16.msra.mxu0 %v1758
        %1790 = vmatprep.subr.bf16.mxu0 0
        %1791 = vmatpush1.bf16.msra.mxu0 %v1759
        %1792 = vmatprep.mubr.bf16.mxu0 %v480
        %1793 = vmatmul.mubr.bf16.gmra.mrb[0].mxu0 %v479
        %v1794 = vpop.f32.mrb[0].mxu0
        %v1795 = vadd.f32 0.0, %v1794
        %v1796 = vpop.f32.mrb[0].mxu0
        %v1797 = vpop.f32.mrb[0].mxu0
        %v1798 = vadd.f32 0.0, %v1797
        %v1799 = vpop.f32.mrb[0].mxu0
        %1800 = vmatprep.mubr.bf16.mxu0 %v482
        %1801 = vmatmul.mubr.bf16.gmra.mrb[0].mxu0 %v481
        %v1802 = vpop.f32.mrb[0].mxu0
        %v1803 = vadd.f32 0.0, %v1802
        %v1804 = vpop.f32.mrb[0].mxu0
        %v1805 = vpop.f32.mrb[0].mxu0
        %v1806 = vadd.f32 0.0, %v1805
        %v1807 = vpop.f32.mrb[0].mxu0
        %1808 = vmatprep.mubr.bf16.mxu0 %v484
        %1809 = vmatmul.mubr.bf16.gmra.mrb[0].mxu0 %v483
        %v1810 = vpop.f32.mrb[0].mxu0
        %v1811 = vadd.f32 0.0, %v1810
        %v1812 = vpop.f32.mrb[0].mxu0
        %v1813 = vpop.f32.mrb[0].mxu0
        %v1814 = vadd.f32 0.0, %v1813
        %v1815 = vpop.f32.mrb[0].mxu0
        %1816 = vmatprep.mubr.bf16.mxu0 %v486
        %1817 = vmatmul.mubr.bf16.gmra.mrb[0].mxu0 %v485
        %v1818 = vpop.f32.mrb[0].mxu0
        %v1819 = vadd.f32 0.0, %v1818
        %v1820 = vpop.f32.mrb[0].mxu0
        %v1821 = vpop.f32.mrb[0].mxu0
        %v1822 = vadd.f32 0.0, %v1821
        %v1823 = vpop.f32.mrb[0].mxu0
        %1824 = vmatprep.mubr.bf16.mxu0 %v488
        %1825 = vmatmul.mubr.bf16.gmra.mrb[0].mxu0 %v487
        %v1826 = vpop.f32.mrb[0].mxu0
        %v1827 = vadd.f32 0.0, %v1826
        %v1828 = vpop.f32.mrb[0].mxu0
        %v1829 = vpop.f32.mrb[0].mxu0
        %v1830 = vadd.f32 0.0, %v1829
        %v1831 = vpop.f32.mrb[0].mxu0
        %1832 = vmatprep.mubr.bf16.mxu0 %v490
        %1833 = vmatmul.mubr.bf16.gmra.mrb[0].mxu0 %v489
        %v1834 = vpop.f32.mrb[0].mxu0
        %v1835 = vadd.f32 0.0, %v1834
        %v1836 = vpop.f32.mrb[0].mxu0
        %v1837 = vpop.f32.mrb[0].mxu0
        %v1838 = vadd.f32 0.0, %v1837
        %v1839 = vpop.f32.mrb[0].mxu0
        %1840 = vmatprep.mubr.bf16.mxu0 %v492
        %1841 = vmatmul.mubr.bf16.gmra.mrb[0].mxu0 %v491
        %v1842 = vpop.f32.mrb[0].mxu0
        %v1843 = vadd.f32 0.0, %v1842
        %v1844 = vpop.f32.mrb[0].mxu0
        %v1845 = vpop.f32.mrb[0].mxu0
        %v1846 = vadd.f32 0.0, %v1845
        %v1847 = vpop.f32.mrb[0].mxu0
        %1848 = vmatprep.mubr.bf16.mxu0 %v494
        %1849 = vmatmul.mubr.bf16.gmra.mrb[0].mxu0 %v493
        %v1850 = vpop.f32.mrb[0].mxu0
        %v1851 = vadd.f32 0.0, %v1850
        %v1852 = vpop.f32.mrb[0].mxu0
        %v1853 = vpop.f32.mrb[0].mxu0
        %v1854 = vadd.f32 0.0, %v1853
        %v1855 = vpop.f32.mrb[0].mxu0
        %1856 = vmatprep.mubr.bf16.mxu0 %v496
        %1857 = vmatmul.mubr.bf16.gmra.mrb[0].mxu0 %v495
        %v1858 = vpop.f32.mrb[0].mxu0
        %v1859 = vadd.f32 0.0, %v1858
        %v1860 = vpop.f32.mrb[0].mxu0
        %v1861 = vpop.f32.mrb[0].mxu0
        %v1862 = vadd.f32 0.0, %v1861
        %v1863 = vpop.f32.mrb[0].mxu0
        %1864 = vmatprep.mubr.bf16.mxu0 %v498
        %1865 = vmatmul.mubr.bf16.gmra.mrb[0].mxu0 %v497
        %v1866 = vpop.f32.mrb[0].mxu0
        %v1867 = vadd.f32 0.0, %v1866
        %v1868 = vpop.f32.mrb[0].mxu0
        %v1869 = vpop.f32.mrb[0].mxu0
        %v1870 = vadd.f32 0.0, %v1869
        %v1871 = vpop.f32.mrb[0].mxu0
        %1872 = vmatprep.mubr.bf16.mxu0 %v500
        %1873 = vmatmul.mubr.bf16.gmra.mrb[0].mxu0 %v499
        %v1874 = vpop.f32.mrb[0].mxu0
        %v1875 = vadd.f32 0.0, %v1874
        %v1876 = vpop.f32.mrb[0].mxu0
        %v1877 = vpop.f32.mrb[0].mxu0
        %v1878 = vadd.f32 0.0, %v1877
        %v1879 = vpop.f32.mrb[0].mxu0
        %1880 = vmatprep.mubr.bf16.mxu0 %v502
        %1881 = vmatmul.mubr.bf16.gmra.mrb[0].mxu0 %v501
        %v1882 = vpop.f32.mrb[0].mxu0
        %v1883 = vadd.f32 0.0, %v1882
        %v1884 = vpop.f32.mrb[0].mxu0
        %v1885 = vpop.f32.mrb[0].mxu0
        %v1886 = vadd.f32 0.0, %v1885
        %v1887 = vpop.f32.mrb[0].mxu0
        %1888 = vmatprep.mubr.bf16.mxu0 %v504
        %1889 = vmatmul.mubr.bf16.gmra.mrb[0].mxu0 %v503
        %v1890 = vpop.f32.mrb[0].mxu0
        %v1891 = vadd.f32 0.0, %v1890
        %v1892 = vpop.f32.mrb[0].mxu0
        %v1893 = vpop.f32.mrb[0].mxu0
        %v1894 = vadd.f32 0.0, %v1893
        %v1895 = vpop.f32.mrb[0].mxu0
        %1896 = vmatprep.mubr.bf16.mxu0 %v506
        %1897 = vmatmul.mubr.bf16.gmra.mrb[0].mxu0 %v505
        %v1898 = vpop.f32.mrb[0].mxu0
        %v1899 = vadd.f32 0.0, %v1898
        %v1900 = vpop.f32.mrb[0].mxu0
        %v1901 = vpop.f32.mrb[0].mxu0
        %v1902 = vadd.f32 0.0, %v1901
        %v1903 = vpop.f32.mrb[0].mxu0
        %1904 = vmatprep.mubr.bf16.mxu0 %v508
        %1905 = vmatmul.mubr.bf16.gmra.mrb[0].mxu0 %v507
        %v1906 = vpop.f32.mrb[0].mxu0
        %v1907 = vadd.f32 0.0, %v1906
        %v1908 = vpop.f32.mrb[0].mxu0
        %v1909 = vpop.f32.mrb[0].mxu0
        %v1910 = vadd.f32 0.0, %v1909
        %v1911 = vpop.f32.mrb[0].mxu0
        %1912 = vmatprep.mubr.bf16.mxu0 %v510
        %1913 = vmatmul.mubr.bf16.gmra.mrb[0].mxu0 %v509
        %v1914 = vpop.f32.mrb[0].mxu0
        %v1915 = vadd.f32 0.0, %v1914
        %v1916 = vpop.f32.mrb[0].mxu0
        %v1917 = vpop.f32.mrb[0].mxu0
        %v1918 = vadd.f32 0.0, %v1917
        %v1919 = vpop.f32.mrb[0].mxu0
        %1920 = vdwg.mxu0
        %v1921 = vpack.c.bf16 %v1798, %v1795
        %v1922 = vpack.c.bf16 %v1806, %v1803
        %v1923 = vpack.c.bf16 %v1814, %v1811
        %v1924 = vpack.c.bf16 %v1822, %v1819
        %v1925 = vpack.c.bf16 %v1830, %v1827
        %v1926 = vpack.c.bf16 %v1838, %v1835
        %v1927 = vpack.c.bf16 %v1846, %v1843
        %v1928 = vpack.c.bf16 %v1854, %v1851
        %v1929 = vpack.c.bf16 %v1862, %v1859
        %v1930 = vpack.c.bf16 %v1870, %v1867
        %v1931 = vpack.c.bf16 %v1878, %v1875
        %v1932 = vpack.c.bf16 %v1886, %v1883
        %v1933 = vpack.c.bf16 %v1894, %v1891
        %v1934 = vpack.c.bf16 %v1902, %v1899
        %v1935 = vpack.c.bf16 %v1910, %v1907
        %v1936 = vpack.c.bf16 %v1918, %v1915
        %v1937 = vld [vmem:[%s4] sm:$0xf]
        %v1938 = vld [vmem:[%s4 + $0x4] sm:$0xf]
        %v1941 = vunpack.c.l.b16 %v1937
        %v1942 = vunpack.c.l.b16 %v1938
        %v1943 = vpack.c.b16 %v1942, %v1941
        %v1946 = vsel %vm824, %v1921, 0
        %v1949 = vsel %vm824, %v1922, 0
        %v1952 = vsel %vm824, %v1923, 0
        %v1955 = vsel %vm824, %v1924, 0
        %v1958 = vsel %vm824, %v1925, 0
        %v1961 = vsel %vm824, %v1926, 0
        %v1964 = vsel %vm824, %v1927, 0
        %v1967 = vsel %vm824, %v1928, 0
        %v1970 = vsel %vm824, %v1929, 0
        %v1973 = vsel %vm824, %v1930, 0
        %v1976 = vsel %vm824, %v1931, 0
        %v1979 = vsel %vm824, %v1932, 0
        %v1982 = vsel %vm824, %v1933, 0
        %v1985 = vsel %vm824, %v1934, 0
        %v1988 = vsel %vm824, %v1935, 0
        %v1991 = vsel %vm824, %v1936, 0
        %1993 = vmatprep.subr.bf16.mxu0 0
        %1994 = vmatpush1.bf16.msra.mxu0 %v1943
        %1995 = vmatprep.subr.bf16.mxu0 0
        %1996 = vmatpush1.bf16.msra.mxu0 0
        %1997 = vmatprep.subr.bf16.mxu0 0
        %1998 = vmatpush1.bf16.msra.mxu0 0
        %1999 = vmatprep.subr.bf16.mxu0 0
        %2000 = vmatpush1.bf16.msra.mxu0 0
        %2001 = vmatprep.subr.bf16.mxu0 0
        %2002 = vmatpush1.bf16.msra.mxu0 0
        %2003 = vmatprep.subr.bf16.mxu0 0
        %2004 = vmatpush1.bf16.msra.mxu0 0
        %2005 = vmatprep.subr.bf16.mxu0 0
        %2006 = vmatpush1.bf16.msra.mxu0 0
        %2007 = vmatprep.subr.bf16.mxu0 0
        %2008 = vmatpush1.bf16.msra.mxu0 0
        %2009 = vmatprep.subr.bf16.mxu0 0
        %2010 = vmatpush1.bf16.msra.mxu0 0
        %2011 = vmatprep.subr.bf16.mxu0 0
        %2012 = vmatpush1.bf16.msra.mxu0 0
        %2013 = vmatprep.subr.bf16.mxu0 0
        %2014 = vmatpush1.bf16.msra.mxu0 0
        %2015 = vmatprep.subr.bf16.mxu0 0
        %2016 = vmatpush1.bf16.msra.mxu0 0
        %2017 = vmatprep.subr.bf16.mxu0 0
        %2018 = vmatpush1.bf16.msra.mxu0 0
        %2019 = vmatprep.subr.bf16.mxu0 0
        %2020 = vmatpush1.bf16.msra.mxu0 0
        %2021 = vmatprep.subr.bf16.mxu0 0
        %2022 = vmatpush1.bf16.msra.mxu0 0
        %2023 = vmatprep.subr.bf16.mxu0 0
        %2024 = vmatpush1.bf16.msra.mxu0 0
        %2025 = vmatprep.mubr.bf16.mxu0 0
        %2026 = vmatmul.mubr.bf16.gmra.mrb[0].mxu0 %v1946
        %v2027 = vpop.f32.mrb[0].mxu0
        %v2028 = vadd.f32 0.0, %v2027
        %v2029 = vpop.f32.mrb[0].mxu0
        %v2030 = vpop.f32.mrb[0].mxu0
        %v2031 = vadd.f32 0.0, %v2030
        %v2032 = vpop.f32.mrb[0].mxu0
        %2033 = vmatprep.mubr.bf16.mxu0 0
        %2034 = vmatmul.mubr.bf16.gmra.mrb[0].mxu0 %v1949
        %v2035 = vpop.f32.mrb[0].mxu0
        %v2036 = vadd.f32 0.0, %v2035
        %v2037 = vpop.f32.mrb[0].mxu0
        %v2038 = vpop.f32.mrb[0].mxu0
        %v2039 = vadd.f32 0.0, %v2038
        %v2040 = vpop.f32.mrb[0].mxu0
        %2041 = vmatprep.mubr.bf16.mxu0 0
        %2042 = vmatmul.mubr.bf16.gmra.mrb[0].mxu0 %v1952
        %v2043 = vpop.f32.mrb[0].mxu0
        %v2044 = vadd.f32 0.0, %v2043
        %v2045 = vpop.f32.mrb[0].mxu0
        %v2046 = vpop.f32.mrb[0].mxu0
        %v2047 = vadd.f32 0.0, %v2046
        %v2048 = vpop.f32.mrb[0].mxu0
        %2049 = vmatprep.mubr.bf16.mxu0 0
        %2050 = vmatmul.mubr.bf16.gmra.mrb[0].mxu0 %v1955
        %v2051 = vpop.f32.mrb[0].mxu0
        %v2052 = vadd.f32 0.0, %v2051
        %v2053 = vpop.f32.mrb[0].mxu0
        %v2054 = vpop.f32.mrb[0].mxu0
        %v2055 = vadd.f32 0.0, %v2054
        %v2056 = vpop.f32.mrb[0].mxu0
        %2057 = vmatprep.mubr.bf16.mxu0 0
        %2058 = vmatmul.mubr.bf16.gmra.mrb[0].mxu0 %v1958
        %v2059 = vpop.f32.mrb[0].mxu0
        %v2060 = vadd.f32 0.0, %v2059
        %v2061 = vpop.f32.mrb[0].mxu0
        %v2062 = vpop.f32.mrb[0].mxu0
        %v2063 = vadd.f32 0.0, %v2062
        %v2064 = vpop.f32.mrb[0].mxu0
        %2065 = vmatprep.mubr.bf16.mxu0 0
        %2066 = vmatmul.mubr.bf16.gmra.mrb[0].mxu0 %v1961
        %v2067 = vpop.f32.mrb[0].mxu0
        %v2068 = vadd.f32 0.0, %v2067
        %v2069 = vpop.f32.mrb[0].mxu0
        %v2070 = vpop.f32.mrb[0].mxu0
        %v2071 = vadd.f32 0.0, %v2070
        %v2072 = vpop.f32.mrb[0].mxu0
        %2073 = vmatprep.mubr.bf16.mxu0 0
        %2074 = vmatmul.mubr.bf16.gmra.mrb[0].mxu0 %v1964
        %v2075 = vpop.f32.mrb[0].mxu0
        %v2076 = vadd.f32 0.0, %v2075
        %v2077 = vpop.f32.mrb[0].mxu0
        %v2078 = vpop.f32.mrb[0].mxu0
        %v2079 = vadd.f32 0.0, %v2078
        %v2080 = vpop.f32.mrb[0].mxu0
        %2081 = vmatprep.mubr.bf16.mxu0 0
        %2082 = vmatmul.mubr.bf16.gmra.mrb[0].mxu0 %v1967
        %v2083 = vpop.f32.mrb[0].mxu0
        %v2084 = vadd.f32 0.0, %v2083
        %v2085 = vpop.f32.mrb[0].mxu0
        %v2086 = vpop.f32.mrb[0].mxu0
        %v2087 = vadd.f32 0.0, %v2086
        %v2088 = vpop.f32.mrb[0].mxu0
        %2089 = vmatprep.mubr.bf16.mxu0 0
        %2090 = vmatmul.mubr.bf16.gmra.mrb[0].mxu0 %v1970
        %v2091 = vpop.f32.mrb[0].mxu0
        %v2092 = vadd.f32 0.0, %v2091
        %v2093 = vpop.f32.mrb[0].mxu0
        %v2094 = vpop.f32.mrb[0].mxu0
        %v2095 = vadd.f32 0.0, %v2094
        %v2096 = vpop.f32.mrb[0].mxu0
        %2097 = vmatprep.mubr.bf16.mxu0 0
        %2098 = vmatmul.mubr.bf16.gmra.mrb[0].mxu0 %v1973
        %v2099 = vpop.f32.mrb[0].mxu0
        %v2100 = vadd.f32 0.0, %v2099
        %v2101 = vpop.f32.mrb[0].mxu0
        %v2102 = vpop.f32.mrb[0].mxu0
        %v2103 = vadd.f32 0.0, %v2102
        %v2104 = vpop.f32.mrb[0].mxu0
        %2105 = vmatprep.mubr.bf16.mxu0 0
        %2106 = vmatmul.mubr.bf16.gmra.mrb[0].mxu0 %v1976
        %v2107 = vpop.f32.mrb[0].mxu0
        %v2108 = vadd.f32 0.0, %v2107
        %v2109 = vpop.f32.mrb[0].mxu0
        %v2110 = vpop.f32.mrb[0].mxu0
        %v2111 = vadd.f32 0.0, %v2110
        %v2112 = vpop.f32.mrb[0].mxu0
        %2113 = vmatprep.mubr.bf16.mxu0 0
        %2114 = vmatmul.mubr.bf16.gmra.mrb[0].mxu0 %v1979
        %v2115 = vpop.f32.mrb[0].mxu0
        %v2116 = vadd.f32 0.0, %v2115
        %v2117 = vpop.f32.mrb[0].mxu0
        %v2118 = vpop.f32.mrb[0].mxu0
        %v2119 = vadd.f32 0.0, %v2118
        %v2120 = vpop.f32.mrb[0].mxu0
        %2121 = vmatprep.mubr.bf16.mxu0 0
        %2122 = vmatmul.mubr.bf16.gmra.mrb[0].mxu0 %v1982
        %v2123 = vpop.f32.mrb[0].mxu0
        %v2124 = vadd.f32 0.0, %v2123
        %v2125 = vpop.f32.mrb[0].mxu0
        %v2126 = vpop.f32.mrb[0].mxu0
        %v2127 = vadd.f32 0.0, %v2126
        %v2128 = vpop.f32.mrb[0].mxu0
        %2129 = vmatprep.mubr.bf16.mxu0 0
        %2130 = vmatmul.mubr.bf16.gmra.mrb[0].mxu0 %v1985
        %v2131 = vpop.f32.mrb[0].mxu0
        %v2132 = vadd.f32 0.0, %v2131
        %v2133 = vpop.f32.mrb[0].mxu0
        %v2134 = vpop.f32.mrb[0].mxu0
        %v2135 = vadd.f32 0.0, %v2134
        %v2136 = vpop.f32.mrb[0].mxu0
        %2137 = vmatprep.mubr.bf16.mxu0 0
        %2138 = vmatmul.mubr.bf16.gmra.mrb[0].mxu0 %v1988
        %v2139 = vpop.f32.mrb[0].mxu0
        %v2140 = vadd.f32 0.0, %v2139
        %v2141 = vpop.f32.mrb[0].mxu0
        %v2142 = vpop.f32.mrb[0].mxu0
        %v2143 = vadd.f32 0.0, %v2142
        %v2144 = vpop.f32.mrb[0].mxu0
        %2145 = vmatprep.mubr.bf16.mxu0 0
        %2146 = vmatmul.mubr.bf16.gmra.mrb[0].mxu0 %v1991
        %v2147 = vpop.f32.mrb[0].mxu0
        %v2148 = vadd.f32 0.0, %v2147
        %v2149 = vpop.f32.mrb[0].mxu0
        %v2150 = vpop.f32.mrb[0].mxu0
        %v2151 = vadd.f32 0.0, %v2150
        %v2152 = vpop.f32.mrb[0].mxu0
        %2153 = vdwg.mxu0
        %v2154 = vsel %vm824, %v2028, 0.0
        %v2155 = vsel %vm824, %v2031, 0.0
        %v2156 = vadd.f32 %v2154, %v2155
        %v2157 = vsel %vm824, %v2036, 0.0
        %v2158 = vadd.f32 %v2156, %v2157
        %v2159 = vsel %vm824, %v2039, 0.0
        %v2160 = vadd.f32 %v2158, %v2159
        %v2161 = vrot.slane %v2160, 4
        %v2162 = vadd.f32 %v2160, %v2161
        %v2163 = vrot.slane %v2162, 2
        %v2164 = vadd.f32 %v2162, %v2163
        %v2165 = vrot.slane %v2164, 1
        %v2166 = vadd.f32 %v2164, %v2165
        %v2167 = vsel %vm824, %v2044, 0.0
        %v2168 = vsel %vm824, %v2047, 0.0
        %v2169 = vadd.f32 %v2167, %v2168
        %v2170 = vsel %vm824, %v2052, 0.0
        %v2171 = vadd.f32 %v2169, %v2170
        %v2172 = vsel %vm824, %v2055, 0.0
        %v2173 = vadd.f32 %v2171, %v2172
        %v2174 = vrot.slane %v2173, 4
        %v2175 = vadd.f32 %v2173, %v2174
        %v2176 = vrot.slane %v2175, 2
        %v2177 = vadd.f32 %v2175, %v2176
        %v2178 = vrot.slane %v2177, 1
        %v2179 = vadd.f32 %v2177, %v2178
        %v2180 = vsel %vm824, %v2060, 0.0
        %v2181 = vsel %vm824, %v2063, 0.0
        %v2182 = vadd.f32 %v2180, %v2181
        %v2183 = vsel %vm824, %v2068, 0.0
        %v2184 = vadd.f32 %v2182, %v2183
        %v2185 = vsel %vm824, %v2071, 0.0
        %v2186 = vadd.f32 %v2184, %v2185
        %v2187 = vrot.slane %v2186, 4
        %v2188 = vadd.f32 %v2186, %v2187
        %v2189 = vrot.slane %v2188, 2
        %v2190 = vadd.f32 %v2188, %v2189
        %v2191 = vrot.slane %v2190, 1
        %v2192 = vadd.f32 %v2190, %v2191
        %v2193 = vsel %vm824, %v2076, 0.0
        %v2194 = vsel %vm824, %v2079, 0.0
        %v2195 = vadd.f32 %v2193, %v2194
        %v2196 = vsel %vm824, %v2084, 0.0
        %v2197 = vadd.f32 %v2195, %v2196
        %v2198 = vsel %vm824, %v2087, 0.0
        %v2199 = vadd.f32 %v2197, %v2198
        %v2200 = vrot.slane %v2199, 4
        %v2201 = vadd.f32 %v2199, %v2200
        %v2202 = vrot.slane %v2201, 2
        %v2203 = vadd.f32 %v2201, %v2202
        %v2204 = vrot.slane %v2203, 1
        %v2205 = vadd.f32 %v2203, %v2204
        %v2206 = vsel %vm824, %v2092, 0.0
        %v2207 = vsel %vm824, %v2095, 0.0
        %v2208 = vadd.f32 %v2206, %v2207
        %v2209 = vsel %vm824, %v2100, 0.0
        %v2210 = vadd.f32 %v2208, %v2209
        %v2211 = vsel %vm824, %v2103, 0.0
        %v2212 = vadd.f32 %v2210, %v2211
        %v2213 = vrot.slane %v2212, 4
        %v2214 = vadd.f32 %v2212, %v2213
        %v2215 = vrot.slane %v2214, 2
        %v2216 = vadd.f32 %v2214, %v2215
        %v2217 = vrot.slane %v2216, 1
        %v2218 = vadd.f32 %v2216, %v2217
        %v2219 = vsel %vm824, %v2108, 0.0
        %v2220 = vsel %vm824, %v2111, 0.0
        %v2221 = vadd.f32 %v2219, %v2220
        %v2222 = vsel %vm824, %v2116, 0.0
        %v2223 = vadd.f32 %v2221, %v2222
        %v2224 = vsel %vm824, %v2119, 0.0
        %v2225 = vadd.f32 %v2223, %v2224
        %v2226 = vrot.slane %v2225, 4
        %v2227 = vadd.f32 %v2225, %v2226
        %v2228 = vrot.slane %v2227, 2
        %v2229 = vadd.f32 %v2227, %v2228
        %v2230 = vrot.slane %v2229, 1
        %v2231 = vadd.f32 %v2229, %v2230
        %v2232 = vsel %vm824, %v2124, 0.0
        %v2233 = vsel %vm824, %v2127, 0.0
        %v2234 = vadd.f32 %v2232, %v2233
        %v2235 = vsel %vm824, %v2132, 0.0
        %v2236 = vadd.f32 %v2234, %v2235
        %v2237 = vsel %vm824, %v2135, 0.0
        %v2238 = vadd.f32 %v2236, %v2237
        %v2239 = vrot.slane %v2238, 4
        %v2240 = vadd.f32 %v2238, %v2239
        %v2241 = vrot.slane %v2240, 2
        %v2242 = vadd.f32 %v2240, %v2241
        %v2243 = vrot.slane %v2242, 1
        %v2244 = vadd.f32 %v2242, %v2243
        %v2245 = vsel %vm824, %v2140, 0.0
        %v2246 = vsel %vm824, %v2143, 0.0
        %v2247 = vadd.f32 %v2245, %v2246
        %v2248 = vsel %vm824, %v2148, 0.0
        %v2249 = vadd.f32 %v2247, %v2248
        %v2250 = vsel %vm824, %v2151, 0.0
        %v2251 = vadd.f32 %v2249, %v2250
        %v2252 = vrot.slane %v2251, 4
        %v2253 = vadd.f32 %v2251, %v2252
        %v2254 = vrot.slane %v2253, 2
        %v2255 = vadd.f32 %v2253, %v2254
        %v2256 = vrot.slane %v2255, 1
        %v2257 = vadd.f32 %v2255, %v2256
        %v2258 = vmul.f32 %v2166, %v1138
        %v2259 = vmul.f32 %v2179, %v1138
        %v2260 = vmul.f32 %v2192, %v1138
        %v2261 = vmul.f32 %v2205, %v1138
        %v2262 = vmul.f32 %v2218, %v1138
        %v2263 = vmul.f32 %v2231, %v1138
        %v2264 = vmul.f32 %v2244, %v1138
        %v2265 = vmul.f32 %v2257, %v1138
        %v2266 = vsub.f32 %v2028, %v2258
        %v2267 = vsub.f32 %v2031, %v2258
        %v2268 = vsub.f32 %v2036, %v2258
        %v2269 = vsub.f32 %v2039, %v2258
        %v2270 = vsub.f32 %v2044, %v2259
        %v2271 = vsub.f32 %v2047, %v2259
        %v2272 = vsub.f32 %v2052, %v2259
        %v2273 = vsub.f32 %v2055, %v2259
        %v2274 = vsub.f32 %v2060, %v2260
        %v2275 = vsub.f32 %v2063, %v2260
        %v2276 = vsub.f32 %v2068, %v2260
        %v2277 = vsub.f32 %v2071, %v2260
        %v2278 = vsub.f32 %v2076, %v2261
        %v2279 = vsub.f32 %v2079, %v2261
        %v2280 = vsub.f32 %v2084, %v2261
        %v2281 = vsub.f32 %v2087, %v2261
        %v2282 = vsub.f32 %v2092, %v2262
        %v2283 = vsub.f32 %v2095, %v2262
        %v2284 = vsub.f32 %v2100, %v2262
        %v2285 = vsub.f32 %v2103, %v2262
        %v2286 = vsub.f32 %v2108, %v2263
        %v2287 = vsub.f32 %v2111, %v2263
        %v2288 = vsub.f32 %v2116, %v2263
        %v2289 = vsub.f32 %v2119, %v2263
        %v2290 = vsub.f32 %v2124, %v2264
        %v2291 = vsub.f32 %v2127, %v2264
        %v2292 = vsub.f32 %v2132, %v2264
        %v2293 = vsub.f32 %v2135, %v2264
        %v2294 = vsub.f32 %v2140, %v2265
        %v2295 = vsub.f32 %v2143, %v2265
        %v2296 = vsub.f32 %v2148, %v2265
        %v2297 = vsub.f32 %v2151, %v2265
        %v2298 = vmul.f32 %v2266, %v2266
        %v2299 = vmul.f32 %v2267, %v2267
        %v2300 = vmul.f32 %v2268, %v2268
        %v2301 = vmul.f32 %v2269, %v2269
        %v2302 = vmul.f32 %v2270, %v2270
        %v2303 = vmul.f32 %v2271, %v2271
        %v2304 = vmul.f32 %v2272, %v2272
        %v2305 = vmul.f32 %v2273, %v2273
        %v2306 = vmul.f32 %v2274, %v2274
        %v2307 = vmul.f32 %v2275, %v2275
        %v2308 = vmul.f32 %v2276, %v2276
        %v2309 = vmul.f32 %v2277, %v2277
        %v2310 = vmul.f32 %v2278, %v2278
        %v2311 = vmul.f32 %v2279, %v2279
        %v2312 = vmul.f32 %v2280, %v2280
        %v2313 = vmul.f32 %v2281, %v2281
        %v2314 = vmul.f32 %v2282, %v2282
        %v2315 = vmul.f32 %v2283, %v2283
        %v2316 = vmul.f32 %v2284, %v2284
        %v2317 = vmul.f32 %v2285, %v2285
        %v2318 = vmul.f32 %v2286, %v2286
        %v2319 = vmul.f32 %v2287, %v2287
        %v2320 = vmul.f32 %v2288, %v2288
        %v2321 = vmul.f32 %v2289, %v2289
        %v2322 = vmul.f32 %v2290, %v2290
        %v2323 = vmul.f32 %v2291, %v2291
        %v2324 = vmul.f32 %v2292, %v2292
        %v2325 = vmul.f32 %v2293, %v2293
        %v2326 = vmul.f32 %v2294, %v2294
        %v2327 = vmul.f32 %v2295, %v2295
        %v2328 = vmul.f32 %v2296, %v2296
        %v2329 = vmul.f32 %v2297, %v2297
        %v2330 = vsel %vm824, %v2298, 0.0
        %v2331 = vsel %vm824, %v2299, 0.0
        %v2332 = vadd.f32 %v2330, %v2331
        %v2333 = vsel %vm824, %v2300, 0.0
        %v2334 = vadd.f32 %v2332, %v2333
        %v2335 = vsel %vm824, %v2301, 0.0
        %v2336 = vadd.f32 %v2334, %v2335
        %v2337 = vrot.slane %v2336, 4
        %v2338 = vadd.f32 %v2336, %v2337
        %v2339 = vrot.slane %v2338, 2
        %v2340 = vadd.f32 %v2338, %v2339
        %v2341 = vrot.slane %v2340, 1
        %v2342 = vadd.f32 %v2340, %v2341
        %v2343 = vsel %vm824, %v2302, 0.0
        %v2344 = vsel %vm824, %v2303, 0.0
        %v2345 = vadd.f32 %v2343, %v2344
        %v2346 = vsel %vm824, %v2304, 0.0
        %v2347 = vadd.f32 %v2345, %v2346
        %v2348 = vsel %vm824, %v2305, 0.0
        %v2349 = vadd.f32 %v2347, %v2348
        %v2350 = vrot.slane %v2349, 4
        %v2351 = vadd.f32 %v2349, %v2350
        %v2352 = vrot.slane %v2351, 2
        %v2353 = vadd.f32 %v2351, %v2352
        %v2354 = vrot.slane %v2353, 1
        %v2355 = vadd.f32 %v2353, %v2354
        %v2356 = vsel %vm824, %v2306, 0.0
        %v2357 = vsel %vm824, %v2307, 0.0
        %v2358 = vadd.f32 %v2356, %v2357
        %v2359 = vsel %vm824, %v2308, 0.0
        %v2360 = vadd.f32 %v2358, %v2359
        %v2361 = vsel %vm824, %v2309, 0.0
        %v2362 = vadd.f32 %v2360, %v2361
        %v2363 = vrot.slane %v2362, 4
        %v2364 = vadd.f32 %v2362, %v2363
        %v2365 = vrot.slane %v2364, 2
        %v2366 = vadd.f32 %v2364, %v2365
        %v2367 = vrot.slane %v2366, 1
        %v2368 = vadd.f32 %v2366, %v2367
        %v2369 = vsel %vm824, %v2310, 0.0
        %v2370 = vsel %vm824, %v2311, 0.0
        %v2371 = vadd.f32 %v2369, %v2370
        %v2372 = vsel %vm824, %v2312, 0.0
        %v2373 = vadd.f32 %v2371, %v2372
        %v2374 = vsel %vm824, %v2313, 0.0
        %v2375 = vadd.f32 %v2373, %v2374
        %v2376 = vrot.slane %v2375, 4
        %v2377 = vadd.f32 %v2375, %v2376
        %v2378 = vrot.slane %v2377, 2
        %v2379 = vadd.f32 %v2377, %v2378
        %v2380 = vrot.slane %v2379, 1
        %v2381 = vadd.f32 %v2379, %v2380
        %v2382 = vsel %vm824, %v2314, 0.0
        %v2383 = vsel %vm824, %v2315, 0.0
        %v2384 = vadd.f32 %v2382, %v2383
        %v2385 = vsel %vm824, %v2316, 0.0
        %v2386 = vadd.f32 %v2384, %v2385
        %v2387 = vsel %vm824, %v2317, 0.0
        %v2388 = vadd.f32 %v2386, %v2387
        %v2389 = vrot.slane %v2388, 4
        %v2390 = vadd.f32 %v2388, %v2389
        %v2391 = vrot.slane %v2390, 2
        %v2392 = vadd.f32 %v2390, %v2391
        %v2393 = vrot.slane %v2392, 1
        %v2394 = vadd.f32 %v2392, %v2393
        %v2395 = vsel %vm824, %v2318, 0.0
        %v2396 = vsel %vm824, %v2319, 0.0
        %v2397 = vadd.f32 %v2395, %v2396
        %v2398 = vsel %vm824, %v2320, 0.0
        %v2399 = vadd.f32 %v2397, %v2398
        %v2400 = vsel %vm824, %v2321, 0.0
        %v2401 = vadd.f32 %v2399, %v2400
        %v2402 = vrot.slane %v2401, 4
        %v2403 = vadd.f32 %v2401, %v2402
        %v2404 = vrot.slane %v2403, 2
        %v2405 = vadd.f32 %v2403, %v2404
        %v2406 = vrot.slane %v2405, 1
        %v2407 = vadd.f32 %v2405, %v2406
        %v2408 = vsel %vm824, %v2322, 0.0
        %v2409 = vsel %vm824, %v2323, 0.0
        %v2410 = vadd.f32 %v2408, %v2409
        %v2411 = vsel %vm824, %v2324, 0.0
        %v2412 = vadd.f32 %v2410, %v2411
        %v2413 = vsel %vm824, %v2325, 0.0
        %v2414 = vadd.f32 %v2412, %v2413
        %v2415 = vrot.slane %v2414, 4
        %v2416 = vadd.f32 %v2414, %v2415
        %v2417 = vrot.slane %v2416, 2
        %v2418 = vadd.f32 %v2416, %v2417
        %v2419 = vrot.slane %v2418, 1
        %v2420 = vadd.f32 %v2418, %v2419
        %v2421 = vsel %vm824, %v2326, 0.0
        %v2422 = vsel %vm824, %v2327, 0.0
        %v2423 = vadd.f32 %v2421, %v2422
        %v2424 = vsel %vm824, %v2328, 0.0
        %v2425 = vadd.f32 %v2423, %v2424
        %v2426 = vsel %vm824, %v2329, 0.0
        %v2427 = vadd.f32 %v2425, %v2426
        %v2428 = vrot.slane %v2427, 4
        %v2429 = vadd.f32 %v2427, %v2428
        %v2430 = vrot.slane %v2429, 2
        %v2431 = vadd.f32 %v2429, %v2430
        %v2432 = vrot.slane %v2431, 1
        %v2433 = vadd.f32 %v2431, %v2432
        %v2434 = vmul.f32 %v2342, %v1138
        %v2435 = vmul.f32 %v2355, %v1138
        %v2436 = vmul.f32 %v2368, %v1138
        %v2437 = vmul.f32 %v2381, %v1138
        %v2438 = vmul.f32 %v2394, %v1138
        %v2439 = vmul.f32 %v2407, %v1138
        %v2440 = vmul.f32 %v2420, %v1138
        %v2441 = vmul.f32 %v2433, %v1138
        %v2442 = vadd.f32 %v2434, 1e-05
        %v2443 = vadd.f32 %v2435, 1e-05
        %v2444 = vadd.f32 %v2436, 1e-05
        %v2445 = vadd.f32 %v2437, 1e-05
        %v2446 = vadd.f32 %v2438, 1e-05
        %v2447 = vadd.f32 %v2439, 1e-05
        %v2448 = vadd.f32 %v2440, 1e-05
        %v2449 = vadd.f32 %v2441, 1e-05
        %v2450 = vrsqrt.pop %v2442
        %v2451 = vrsqrt.pop %v2443
        %v2452 = vrsqrt.pop %v2444
        %v2453 = vrsqrt.pop %v2445
        %v2454 = vrsqrt.pop %v2446
        %v2455 = vrsqrt.pop %v2447
        %v2456 = vrsqrt.pop %v2448
        %v2457 = vrsqrt.pop %v2449
        %v2458 = vmul.f32 %v2266, %v2450
        %v2459 = vmul.f32 %v2267, %v2450
        %v2460 = vmul.f32 %v2268, %v2450
        %v2461 = vmul.f32 %v2269, %v2450
        %v2462 = vmul.f32 %v2270, %v2451
        %v2463 = vmul.f32 %v2271, %v2451
        %v2464 = vmul.f32 %v2272, %v2451
        %v2465 = vmul.f32 %v2273, %v2451
        %v2466 = vmul.f32 %v2274, %v2452
        %v2467 = vmul.f32 %v2275, %v2452
        %v2468 = vmul.f32 %v2276, %v2452
        %v2469 = vmul.f32 %v2277, %v2452
        %v2470 = vmul.f32 %v2278, %v2453
        %v2471 = vmul.f32 %v2279, %v2453
        %v2472 = vmul.f32 %v2280, %v2453
        %v2473 = vmul.f32 %v2281, %v2453
        %v2474 = vmul.f32 %v2282, %v2454
        %v2475 = vmul.f32 %v2283, %v2454
        %v2476 = vmul.f32 %v2284, %v2454
        %v2477 = vmul.f32 %v2285, %v2454
        %v2478 = vmul.f32 %v2286, %v2455
        %v2479 = vmul.f32 %v2287, %v2455
        %v2480 = vmul.f32 %v2288, %v2455
        %v2481 = vmul.f32 %v2289, %v2455
        %v2482 = vmul.f32 %v2290, %v2456
        %v2483 = vmul.f32 %v2291, %v2456
        %v2484 = vmul.f32 %v2292, %v2456
        %v2485 = vmul.f32 %v2293, %v2456
        %v2486 = vmul.f32 %v2294, %v2457
        %v2487 = vmul.f32 %v2295, %v2457
        %v2488 = vmul.f32 %v2296, %v2457
        %v2489 = vmul.f32 %v2297, %v2457
        %v2490 = vlaneseq
        %v2491 = vshrl.u32 %v2490, 7
        %v2492 = vsub.s32 3, %v2491
        %v2493 = vrot.slane %v350, %v2492
        %v2494 = vmul.f32 %v2458, %v2493
        %v2495 = vmul.f32 %v2459, %v2493
        %v2496 = vmul.f32 %v2460, %v2493
        %v2497 = vmul.f32 %v2461, %v2493
        %v2498 = vmul.f32 %v2462, %v2493
        %v2499 = vmul.f32 %v2463, %v2493
        %v2500 = vmul.f32 %v2464, %v2493
        %v2501 = vmul.f32 %v2465, %v2493
        %v2502 = vmul.f32 %v2466, %v2493
        %v2503 = vmul.f32 %v2467, %v2493
        %v2504 = vmul.f32 %v2468, %v2493
        %v2505 = vmul.f32 %v2469, %v2493
        %v2506 = vmul.f32 %v2470, %v2493
        %v2507 = vmul.f32 %v2471, %v2493
        %v2508 = vmul.f32 %v2472, %v2493
        %v2509 = vmul.f32 %v2473, %v2493
        %v2510 = vmul.f32 %v2474, %v2493
        %v2511 = vmul.f32 %v2475, %v2493
        %v2512 = vmul.f32 %v2476, %v2493
        %v2513 = vmul.f32 %v2477, %v2493
        %v2514 = vmul.f32 %v2478, %v2493
        %v2515 = vmul.f32 %v2479, %v2493
        %v2516 = vmul.f32 %v2480, %v2493
        %v2517 = vmul.f32 %v2481, %v2493
        %v2518 = vmul.f32 %v2482, %v2493
        %v2519 = vmul.f32 %v2483, %v2493
        %v2520 = vmul.f32 %v2484, %v2493
        %v2521 = vmul.f32 %v2485, %v2493
        %v2522 = vmul.f32 %v2486, %v2493
        %v2523 = vmul.f32 %v2487, %v2493
        %v2524 = vmul.f32 %v2488, %v2493
        %v2525 = vmul.f32 %v2489, %v2493
        %v2526 = vlaneseq
        %v2527 = vshrl.u32 %v2526, 7
        %v2528 = vsub.s32 4, %v2527
        %v2529 = vrot.slane %v350, %v2528
        %v2530 = vadd.f32 %v2494, %v2529
        %v2531 = vadd.f32 %v2495, %v2529
        %v2532 = vadd.f32 %v2496, %v2529
        %v2533 = vadd.f32 %v2497, %v2529
        %v2534 = vadd.f32 %v2498, %v2529
        %v2535 = vadd.f32 %v2499, %v2529
        %v2536 = vadd.f32 %v2500, %v2529
        %v2537 = vadd.f32 %v2501, %v2529
        %v2538 = vadd.f32 %v2502, %v2529
        %v2539 = vadd.f32 %v2503, %v2529
        %v2540 = vadd.f32 %v2504, %v2529
        %v2541 = vadd.f32 %v2505, %v2529
        %v2542 = vadd.f32 %v2506, %v2529
        %v2543 = vadd.f32 %v2507, %v2529
        %v2544 = vadd.f32 %v2508, %v2529
        %v2545 = vadd.f32 %v2509, %v2529
        %v2546 = vadd.f32 %v2510, %v2529
        %v2547 = vadd.f32 %v2511, %v2529
        %v2548 = vadd.f32 %v2512, %v2529
        %v2549 = vadd.f32 %v2513, %v2529
        %v2550 = vadd.f32 %v2514, %v2529
        %v2551 = vadd.f32 %v2515, %v2529
        %v2552 = vadd.f32 %v2516, %v2529
        %v2553 = vadd.f32 %v2517, %v2529
        %v2554 = vadd.f32 %v2518, %v2529
        %v2555 = vadd.f32 %v2519, %v2529
        %v2556 = vadd.f32 %v2520, %v2529
        %v2557 = vadd.f32 %v2521, %v2529
        %v2558 = vadd.f32 %v2522, %v2529
        %v2559 = vadd.f32 %v2523, %v2529
        %v2560 = vadd.f32 %v2524, %v2529
        %v2561 = vadd.f32 %v2525, %v2529
        %v2562 = vmax.f32 %v2530, 0.0
        %v2563 = vmax.f32 %v2531, 0.0
        %v2564 = vmax.f32 %v2532, 0.0
        %v2565 = vmax.f32 %v2533, 0.0
        %v2566 = vmax.f32 %v2534, 0.0
        %v2567 = vmax.f32 %v2535, 0.0
        %v2568 = vmax.f32 %v2536, 0.0
        %v2569 = vmax.f32 %v2537, 0.0
        %v2570 = vmax.f32 %v2538, 0.0
        %v2571 = vmax.f32 %v2539, 0.0
        %v2572 = vmax.f32 %v2540, 0.0
        %v2573 = vmax.f32 %v2541, 0.0
        %v2574 = vmax.f32 %v2542, 0.0
        %v2575 = vmax.f32 %v2543, 0.0
        %v2576 = vmax.f32 %v2544, 0.0
        %v2577 = vmax.f32 %v2545, 0.0
        %v2578 = vmax.f32 %v2546, 0.0
        %v2579 = vmax.f32 %v2547, 0.0
        %v2580 = vmax.f32 %v2548, 0.0
        %v2581 = vmax.f32 %v2549, 0.0
        %v2582 = vmax.f32 %v2550, 0.0
        %v2583 = vmax.f32 %v2551, 0.0
        %v2584 = vmax.f32 %v2552, 0.0
        %v2585 = vmax.f32 %v2553, 0.0
        %v2586 = vmax.f32 %v2554, 0.0
        %v2587 = vmax.f32 %v2555, 0.0
        %v2588 = vmax.f32 %v2556, 0.0
        %v2589 = vmax.f32 %v2557, 0.0
        %v2590 = vmax.f32 %v2558, 0.0
        %v2591 = vmax.f32 %v2559, 0.0
        %v2592 = vmax.f32 %v2560, 0.0
        %v2593 = vmax.f32 %v2561, 0.0
        %v2594 = vsel %vm824, %v2562, 0.0
        %v2595 = vsel %vm824, %v2563, 0.0
        %v2596 = vadd.f32 %v2594, %v2595
        %v2597 = vsel %vm824, %v2564, 0.0
        %v2598 = vadd.f32 %v2596, %v2597
        %v2599 = vsel %vm824, %v2565, 0.0
        %v2600 = vadd.f32 %v2598, %v2599
        %v2601 = vrot.slane %v2600, 4
        %v2602 = vadd.f32 %v2600, %v2601
        %v2603 = vrot.slane %v2602, 2
        %v2604 = vadd.f32 %v2602, %v2603
        %v2605 = vrot.slane %v2604, 1
        %v2606 = vadd.f32 %v2604, %v2605
        %v2607 = vsel %vm824, %v2566, 0.0
        %v2608 = vsel %vm824, %v2567, 0.0
        %v2609 = vadd.f32 %v2607, %v2608
        %v2610 = vsel %vm824, %v2568, 0.0
        %v2611 = vadd.f32 %v2609, %v2610
        %v2612 = vsel %vm824, %v2569, 0.0
        %v2613 = vadd.f32 %v2611, %v2612
        %v2614 = vrot.slane %v2613, 4
        %v2615 = vadd.f32 %v2613, %v2614
        %v2616 = vrot.slane %v2615, 2
        %v2617 = vadd.f32 %v2615, %v2616
        %v2618 = vrot.slane %v2617, 1
        %v2619 = vadd.f32 %v2617, %v2618
        %v2620 = vsel %vm824, %v2570, 0.0
        %v2621 = vsel %vm824, %v2571, 0.0
        %v2622 = vadd.f32 %v2620, %v2621
        %v2623 = vsel %vm824, %v2572, 0.0
        %v2624 = vadd.f32 %v2622, %v2623
        %v2625 = vsel %vm824, %v2573, 0.0
        %v2626 = vadd.f32 %v2624, %v2625
        %v2627 = vrot.slane %v2626, 4
        %v2628 = vadd.f32 %v2626, %v2627
        %v2629 = vrot.slane %v2628, 2
        %v2630 = vadd.f32 %v2628, %v2629
        %v2631 = vrot.slane %v2630, 1
        %v2632 = vadd.f32 %v2630, %v2631
        %v2633 = vsel %vm824, %v2574, 0.0
        %v2634 = vsel %vm824, %v2575, 0.0
        %v2635 = vadd.f32 %v2633, %v2634
        %v2636 = vsel %vm824, %v2576, 0.0
        %v2637 = vadd.f32 %v2635, %v2636
        %v2638 = vsel %vm824, %v2577, 0.0
        %v2639 = vadd.f32 %v2637, %v2638
        %v2640 = vrot.slane %v2639, 4
        %v2641 = vadd.f32 %v2639, %v2640
        %v2642 = vrot.slane %v2641, 2
        %v2643 = vadd.f32 %v2641, %v2642
        %v2644 = vrot.slane %v2643, 1
        %v2645 = vadd.f32 %v2643, %v2644
        %v2646 = vsel %vm824, %v2578, 0.0
        %v2647 = vsel %vm824, %v2579, 0.0
        %v2648 = vadd.f32 %v2646, %v2647
        %v2649 = vsel %vm824, %v2580, 0.0
        %v2650 = vadd.f32 %v2648, %v2649
        %v2651 = vsel %vm824, %v2581, 0.0
        %v2652 = vadd.f32 %v2650, %v2651
        %v2653 = vrot.slane %v2652, 4
        %v2654 = vadd.f32 %v2652, %v2653
        %v2655 = vrot.slane %v2654, 2
        %v2656 = vadd.f32 %v2654, %v2655
        %v2657 = vrot.slane %v2656, 1
        %v2658 = vadd.f32 %v2656, %v2657
        %v2659 = vsel %vm824, %v2582, 0.0
        %v2660 = vsel %vm824, %v2583, 0.0
        %v2661 = vadd.f32 %v2659, %v2660
        %v2662 = vsel %vm824, %v2584, 0.0
        %v2663 = vadd.f32 %v2661, %v2662
        %v2664 = vsel %vm824, %v2585, 0.0
        %v2665 = vadd.f32 %v2663, %v2664
        %v2666 = vrot.slane %v2665, 4
        %v2667 = vadd.f32 %v2665, %v2666
        %v2668 = vrot.slane %v2667, 2
        %v2669 = vadd.f32 %v2667, %v2668
        %v2670 = vrot.slane %v2669, 1
        %v2671 = vadd.f32 %v2669, %v2670
        %v2672 = vsel %vm824, %v2586, 0.0
        %v2673 = vsel %vm824, %v2587, 0.0
        %v2674 = vadd.f32 %v2672, %v2673
        %v2675 = vsel %vm824, %v2588, 0.0
        %v2676 = vadd.f32 %v2674, %v2675
        %v2677 = vsel %vm824, %v2589, 0.0
        %v2678 = vadd.f32 %v2676, %v2677
        %v2679 = vrot.slane %v2678, 4
        %v2680 = vadd.f32 %v2678, %v2679
        %v2681 = vrot.slane %v2680, 2
        %v2682 = vadd.f32 %v2680, %v2681
        %v2683 = vrot.slane %v2682, 1
        %v2684 = vadd.f32 %v2682, %v2683
        %v2685 = vsel %vm824, %v2590, 0.0
        %v2686 = vsel %vm824, %v2591, 0.0
        %v2687 = vadd.f32 %v2685, %v2686
        %v2688 = vsel %vm824, %v2592, 0.0
        %v2689 = vadd.f32 %v2687, %v2688
        %v2690 = vsel %vm824, %v2593, 0.0
        %v2691 = vadd.f32 %v2689, %v2690
        %v2692 = vrot.slane %v2691, 4
        %v2693 = vadd.f32 %v2691, %v2692
        %v2694 = vrot.slane %v2693, 2
        %v2695 = vadd.f32 %v2693, %v2694
        %v2696 = vrot.slane %v2695, 1
        %v2697 = vadd.f32 %v2695, %v2696
        %v2698 = vmul.f32 %v2606, %v1138
        %v2699 = vmul.f32 %v2619, %v1138
        %v2700 = vmul.f32 %v2632, %v1138
        %v2701 = vmul.f32 %v2645, %v1138
        %v2702 = vmul.f32 %v2658, %v1138
        %v2703 = vmul.f32 %v2671, %v1138
        %v2704 = vmul.f32 %v2684, %v1138
        %v2705 = vmul.f32 %v2697, %v1138
        %v2706 = vpack.c.bf16 %v2698, %v2698
        %v2707 = vpack.c.bf16 %v2699, %v2699
        %v2708 = vpack.c.bf16 %v2700, %v2700
        %v2709 = vpack.c.bf16 %v2701, %v2701
        %v2710 = vpack.c.bf16 %v2702, %v2702
        %v2711 = vpack.c.bf16 %v2703, %v2703
        %v2712 = vpack.c.bf16 %v2704, %v2704
        %v2713 = vpack.c.bf16 %v2705, %v2705
        %v2714 = vld [vmem:[%s5] sm:$0xf]
        %v2715 = vld [vmem:[%s5 + $0x4] sm:$0xf]
        %v2716 = vlaneseq
        %v2717 = vshrl.u32 %v2716, 7
        %v2718 = vsub.s32 5, %v2717
        %v2719 = vrot.slane %v350, %v2718
        %v2728 = vunpack.c.l.b16 %v2706
        %v2729 = vunpack.c.l.b16 %v2707
        %v2730 = vunpack.c.l.b16 %v2708
        %v2731 = vunpack.c.l.b16 %v2709
        %v2732 = vunpack.c.l.b16 %v2710
        %v2733 = vunpack.c.l.b16 %v2711
        %v2734 = vunpack.c.l.b16 %v2712
        %v2735 = vunpack.c.l.b16 %v2713
        %vm2736 = vcmask 1041409
        %v2737 = vsel %vm2736, %v2729, %v2728
        %vm2738 = vcmask 1042434
        %v2739 = vsel %vm2738, %v2730, %v2737
        %vm2740 = vcmask 1043459
        %v2741 = vsel %vm2740, %v2731, %v2739
        %vm2742 = vcmask 1044484
        %v2743 = vsel %vm2742, %v2732, %v2741
        %vm2744 = vcmask 1045509
        %v2745 = vsel %vm2744, %v2733, %v2743
        %vm2746 = vcmask 1046534
        %v2747 = vsel %vm2746, %v2734, %v2745
        %vm2748 = vcmask 1047559
        %v2749 = vsel %vm2748, %v2735, %v2747
        %v2750 = vpack.c.b16 %v2749, %v2749
        %v2753 = vunpack.c.l.b16 %v2714
        %v2754 = vunpack.c.l.b16 %v2715
        %v2755 = vpack.c.b16 %v2754, %v2753
        %v2758 = vsel %vm824, %v2750, 0
        %2760 = vmatprep.subr.bf16.mxu0 0
        %2761 = vmatpush1.bf16.msra.mxu0 %v2755
        %2762 = vmatprep.subr.bf16.mxu0 0
        %2763 = vmatpush1.bf16.msra.mxu0 0
        %2764 = vmatprep.subr.bf16.mxu0 0
        %2765 = vmatpush1.bf16.msra.mxu0 0
        %2766 = vmatprep.subr.bf16.mxu0 0
        %2767 = vmatpush1.bf16.msra.mxu0 0
        %2768 = vmatprep.subr.bf16.mxu0 0
        %2769 = vmatpush1.bf16.msra.mxu0 0
        %2770 = vmatprep.subr.bf16.mxu0 0
        %2771 = vmatpush1.bf16.msra.mxu0 0
        %2772 = vmatprep.subr.bf16.mxu0 0
        %2773 = vmatpush1.bf16.msra.mxu0 0
        %2774 = vmatprep.subr.bf16.mxu0 0
        %2775 = vmatpush1.bf16.msra.mxu0 0
        %2776 = vmatprep.subr.bf16.mxu0 0
        %2777 = vmatpush1.bf16.msra.mxu0 0
        %2778 = vmatprep.subr.bf16.mxu0 0
        %2779 = vmatpush1.bf16.msra.mxu0 0
        %2780 = vmatprep.subr.bf16.mxu0 0
        %2781 = vmatpush1.bf16.msra.mxu0 0
        %2782 = vmatprep.subr.bf16.mxu0 0
        %2783 = vmatpush1.bf16.msra.mxu0 0
        %2784 = vmatprep.subr.bf16.mxu0 0
        %2785 = vmatpush1.bf16.msra.mxu0 0
        %2786 = vmatprep.subr.bf16.mxu0 0
        %2787 = vmatpush1.bf16.msra.mxu0 0
        %2788 = vmatprep.subr.bf16.mxu0 0
        %2789 = vmatpush1.bf16.msra.mxu0 0
        %2790 = vmatprep.subr.bf16.mxu0 0
        %2791 = vmatpush1.bf16.msra.mxu0 0
        %2792 = vmatprep.mubr.bf16.mxu0 0
        %2793 = vmatmul.mubr.bf16.gmra.mrb[0].mxu0 %v2758
        %v2794 = vpop.f32.mrb[0].mxu0
        %v2795 = vadd.f32 %v2719, %v2794
        %v2796 = vpop.f32.mrb[0].mxu0
        %v2797 = vpop.f32.mrb[0].mxu0
        %v2798 = vpop.f32.mrb[0].mxu0
        %2799 = vdwg.mxu0
        %2800 = vst.msk [vmem:[%s311] sm:$0xff] %vm824, %v2795
        %s2801 = sand.u32 %s189, 1
        %s2802 = scalar_lea.sflag [#allocation4], %s2801
        %s2803 = sand.u32 %s189, 1
        %s2804 = smul.addr %s2803, 8
        %s2805 = scalar_lea.vmem [#allocation5], %s2804
        // Predicated region
        $region53: #{tpu_custom_call.1} parent=47 // pred_check
          %p2806 = pneg %p199
        $region54: #{tpu_custom_call.1} parent=47 // pred_check_branch
          %2808 = sbr.rel (%p2806) target = $region56
        $region55: #{tpu_custom_call.1} parent=47 // pred_region
          %s2810 = ssub.s32 128, 128
          %2811 = vsyncadd %s2802, %s2810
          %s2812 = smul.addr %s24, 128
          %s2813 = scalar_lea.hbm %s7, %s2812
          %s2815 = sshll.u32 %s2805, 4
          %s2816 = int_to_ptr.vmem [resolvable:$true] %s2815
          %2818 = dma.vmem_to_hbm [thread:$0]  %s2816, 128, %s2813, %s2802
        $region56: #{tpu_custom_call.1} parent=47 // pred_fallthru
          _
      $region48: #{tpu_custom_call.1} parent=5 // pred_fallthru
        _
      %p2819 = scmp.le.s32.totalorder 2, %s19
      // Predicated region
      $region57: #{tpu_custom_call.1} parent=5 // pred_check
        %p2820 = pneg %p2819
      $region58: #{tpu_custom_call.1} parent=5 // pred_check_branch
        %2822 = sbr.rel (%p2820) target = $region60
      $region59: #{tpu_custom_call.1} parent=5 // pred_region
        %s2823 = ssub.s32 %s19, 2
        // Predicated region
        $region61: #{tpu_custom_call.1} parent=59 // pred_check
          %p2824 = pneg %p205
        $region62: #{tpu_custom_call.1} parent=59 // pred_check_branch
          %2826 = sbr.rel (%p2824) target = $region64
        $region63: #{tpu_custom_call.1} parent=59 // pred_region
          %s2827 = sand.u32 %s190, 1
          %s2828 = scalar_lea.sflag [#allocation4], %s2827
          %s2829 = sand.u32 %s190, 1
          %s2830 = smul.addr %s2829, 8
          %s2831 = scalar_lea.vmem [#allocation5], %s2830
          %2832 = dma.done %s2828, 128
        $region64: #{tpu_custom_call.1} parent=59 // pred_fallthru
          _
      $region60: #{tpu_custom_call.1} parent=5 // pred_fallthru
        _
    $region6: #{tpu_custom_call.1} parent=1 // loop_footer
      %s23 = sadd.s32 1, %s19
    $region7: #{tpu_custom_call.1} parent=1 // loop_footer_branch
      %18 = sbr.rel target = $region3
    $region8: #{tpu_custom_call.1} parent=1 // loop_exit
      _
    %2833 = vsyncpa [#allocation3], 1
    %s2834 = scalar_lea.sflag [#allocation3], 1
    %2835 = vsyncpa %s2834, 1
    %2836 = vsyncpa [#allocation4], 1
    %s2837 = scalar_lea.sflag [#allocation4], 1
    %2838 = vsyncpa %s2837, 1

</llo_original>
